<compile_context>
chip_gen: v7x
topology: tpu7x:2x2x1
jax: 0.10.0
libtpu: 0.0.40
codegen_flags: <defaults>
</compile_context>

<pallas_src>
import jax
import jax.numpy as jnp
from jax.experimental import pallas as pl
from jax.experimental.pallas import tpu as pltpu

H1, H2 = 256, 128


def _round_up(n, m):
    return ((n + m - 1) // m) * m


def _vmem_bytes(tb, d):
    """Rough per-step VMEM footprint (x/out double-buffered, weights single)."""
    return (2 * tb * d * 4              # x tile (f32) x 2 buffers
            + 2 * tb * 4                # (1, 1, tb) output block x 2 buffers
            + tb * (H1 + H2) * 4        # h1 / h2 intermediates (f32)
            + d * H1 * 2 + H1 * H2 * 2  # W1, W2 (bf16, resident)
            + (H1 + 2 * H2 + 8) * 4)    # b1, b2, w3 row, b3


def generator_kernel(x_ref, w1_ref, b1_ref, w2_ref, b2_ref, w3_ref, b3_ref, o_ref):
    # Layer 1: Linear(D, 256) + ReLU.  (Dropout = identity in eval mode.)
    # x arrives f32; the bf16 cast runs on the VPU inside the kernel instead of
    # as a separate wrapper-side XLA pass over HBM.
    x = x_ref[...].astype(jnp.bfloat16)
    h1 = jnp.dot(x, w1_ref[...], preferred_element_type=jnp.float32)
    h1 = jnp.maximum(h1 + b1_ref[...], 0.0)

    # Layer 2: Linear(256, 128) + ReLU.  (Dropout = identity in eval mode.)
    h2 = jnp.dot(h1.astype(jnp.bfloat16), w2_ref[...],
                 preferred_element_type=jnp.float32)
    h2 = jnp.maximum(h2 + b2_ref[...], 0.0)

    # Layer 3: Linear(128, 1) as VPU multiply + XLU lane-reduction
    # (an N=1 MXU matmul would use a single column of the systolic array).
    # (tb,128)*(1,128) -> lane sum -> (tb,), + scalar bias read from SMEM.
    out = jnp.sum(h2 * w3_ref[...], axis=-1) + b3_ref[0]
    o_ref[...] = out.reshape(o_ref.shape).astype(o_ref.dtype)   # (1, 1, tb)


def _pick_tile(B, D, tb):
    """Batch-tile selection: multiple of 128, VMEM-safe, >= 2 grid steps when
    possible, and (if cheap) an exact divisor of B to skip the pad copy."""
    tb = max(128, (min(tb, _round_up(B, 128)) // 128) * 128)
    # Keep the per-step footprint well under v7x's 64 MiB physical VMEM.
    while tb > 128 and _vmem_bytes(tb, D) > (40 << 20):
        tb -= 128
    # Prefer >= 2 grid steps so the parallel axis can shard across the two
    # TensorCores of a v7x chip (one extra ~0.35us step on v5e/v6e: negligible).
    if pl.cdiv(B, tb) < 2 and tb > 128:
        tb = max(128, ((tb // 2 + 127) // 128) * 128)
    # If a tile >= tb/2 divides B exactly, take it: removes the jnp.pad HBM
    # copy and the wasted MXU work on padded rows.
    for cand in range(tb, max(128, tb // 2) - 1, -128):
        if B % cand == 0:
            return cand
    return tb


def generator_forward(x, params, *, tb=1024):
    """x: (B, D) float32.  params: dict of w1,b1,w2,b2,w3,b3 (w_i as (in,out)).

    tb: requested batch tile (multiple of 128 -> lane-dense output row block).
    Sweep 512/1024/2048 for large B; the wrapper clamps it for small batches,
    the VMEM budget, and v7x's two TensorCores.
    """
    B, D = x.shape

    tb = _pick_tile(B, D, tb)
    num_tiles = pl.cdiv(B, tb)
    B_pad = num_tiles * tb
    if B_pad != B:
        x = jnp.pad(x, ((0, B_pad - B), (0, 0)))

    # bf16 weights for the MXU (tiny, one-time); x stays f32 and is cast
    # in-kernel.  Biases / layer-3 row stay f32 (VPU path); b3 is an SMEM scalar.
    w1 = params["w1"].astype(jnp.bfloat16)
    w2 = params["w2"].astype(jnp.bfloat16)
    b1 = params["b1"]
    b2 = params["b2"]
    w3_row = params["w3"].reshape(1, H2).astype(jnp.float32)   # (1, 128)
    b3 = params["b3"].reshape(1).astype(jnp.float32)           # (1,) -> SMEM

    vmem_limit = int(min(max(2 * _vmem_bytes(tb, D) + (8 << 20), 32 << 20), 48 << 20))

    def call(resident_weights):
        def wspec(shape):
            # Constant block index across the grid -> weights stay resident;
            # Buffered(1) drops the pointless second buffer.
            if resident_weights:
                return pl.BlockSpec(shape, lambda i: (0, 0),
                                    pipeline_mode=pl.Buffered(1))
            return pl.BlockSpec(shape, lambda i: (0, 0))

        return pl.pallas_call(
            generator_kernel,
            out_shape=jax.ShapeDtypeStruct((num_tiles, 1, tb), jnp.float32),
            grid=(num_tiles,),
            in_specs=[
                pl.BlockSpec((tb, D), lambda i: (i, 0)),            # x tile over batch
                wspec((D, H1)),                                     # W1 (resident)
                wspec((1, H1)),                                     # b1
                wspec((H1, H2)),                                    # W2 (resident)
                wspec((1, H2)),                                     # b2
                wspec((1, H2)),                                     # W3 as a row (VPU path)
                pl.BlockSpec(memory_space=pltpu.MemorySpace.SMEM),  # b3 scalar
            ],
            # Lane-dense output row: tb is a multiple of 128 -> unmasked vst.
            out_specs=pl.BlockSpec((1, 1, tb), lambda i: (i, 0, 0)),
            compiler_params=pltpu.CompilerParams(
                dimension_semantics=("parallel",),
                vmem_limit_bytes=vmem_limit,
            ),
        )(x, w1, b1, w2, b2, w3_row, b3)

    try:
        out = call(resident_weights=True)
    except Exception:
        # Fallback for JAX versions without BlockSpec pipeline_mode support
        # (default double-buffered weight specs; correctness identical).
        out = call(resident_weights=False)

    # (num_tiles, 1, tb) -> (B, 1); padded rows are sliced off here.
    return out.reshape(B_pad, 1)[:B]


def init_params(key, input_dim):
    """Deterministic synthetic init (PyTorch-Linear-like uniform bounds)."""
    ks = jax.random.split(key, 6)

    def lin(kw, kb, fan_in, fan_out):
        bound = 1.0 / jnp.sqrt(fan_in)
        w = jax.random.uniform(kw, (fan_in, fan_out), jnp.float32, -bound, bound)
        b = jax.random.uniform(kb, (1, fan_out), jnp.float32, -bound, bound)
        return w, b

    w1, b1 = lin(ks[0], ks[1], input_dim, H1)
    w2, b2 = lin(ks[2], ks[3], H1, H2)
    w3, b3 = lin(ks[4], ks[5], H2, 1)
    return {"w1": w1, "b1": b1, "w2": w2, "b2": b2, "w3": w3, "b3": b3}


def reference_forward(x, p):
    h1 = jnp.maximum(x @ p["w1"] + p["b1"], 0.0)
    h2 = jnp.maximum(h1 @ p["w2"] + p["b2"], 0.0)
    return h2 @ p["w3"] + p["b3"]


if __name__ == "__main__":
    key = jax.random.PRNGKey(0)
    k_x, k_x2, k_p = jax.random.split(key, 3)

    batch, input_dim = 8, 32
    x = jax.random.normal(k_x, (batch, input_dim), jnp.float32)
    params = init_params(k_p, input_dim)

    out = generator_forward(x, params)
    out = jax.block_until_ready(out)
    ref = reference_forward(x, params)
    assert out.shape == (batch, 1), out.shape
    # bf16 MXU operands with f32 accumulation -> compare against the f32
    # reference with a correspondingly loosened tolerance.
    assert jnp.allclose(out, ref, atol=2e-2, rtol=2e-2), "mismatch vs reference"

    # Second check: multi-tile path (grid > 1, no padding needed).
    batch2 = 384
    x2 = jax.random.normal(k_x2, (batch2, input_dim), jnp.float32)
    out2 = jax.block_until_ready(generator_forward(x2, params))
    ref2 = reference_forward(x2, params)
    assert out2.shape == (batch2, 1), out2.shape
    assert jnp.allclose(out2, ref2, atol=2e-2, rtol=2e-2), "mismatch (tiled) vs reference"

    print("KERNEL_OK")
</pallas_src>

<mosaic_0001>
module attributes {stable_mosaic.version = 11 : i64} {
  func.func @generator_kernel(%arg0: i32, %arg1: memref<128x32xf32, #tpu.memory_space<vmem>>, %arg2: memref<32x256xbf16, #tpu.memory_space<vmem>>, %arg3: memref<1x256xf32, #tpu.memory_space<vmem>>, %arg4: memref<256x128xbf16, #tpu.memory_space<vmem>>, %arg5: memref<1x128xf32, #tpu.memory_space<vmem>>, %arg6: memref<1x128xf32, #tpu.memory_space<vmem>>, %arg7: memref<1xf32, #tpu.memory_space<smem>>, %arg8: memref<1x1x128xf32, #tpu.memory_space<vmem>>) attributes {dimension_semantics = [#tpu.dimension_semantics<parallel>], iteration_bounds = array<i64: 1>, scalar_prefetch = 0 : i64, scratch_operands = 0 : i64, tpu.core_type = #tpu.core_type<tc>, window_params = [{transform_indices = @transform_0, window_bounds = array<i64: 128, 32>}, {pipeline_mode = #tpu.pipeline_mode<synchronous>, transform_indices = @transform_1, window_bounds = array<i64: 32, 256>}, {pipeline_mode = #tpu.pipeline_mode<synchronous>, transform_indices = @transform_2, window_bounds = array<i64: 1, 256>}, {pipeline_mode = #tpu.pipeline_mode<synchronous>, transform_indices = @transform_3, window_bounds = array<i64: 256, 128>}, {pipeline_mode = #tpu.pipeline_mode<synchronous>, transform_indices = @transform_4, window_bounds = array<i64: 1, 128>}, {pipeline_mode = #tpu.pipeline_mode<synchronous>, transform_indices = @transform_5, window_bounds = array<i64: 1, 128>}, {transform_indices = @transform_6, window_bounds = array<i64: 1>}, {transform_indices = @transform_7, window_bounds = array<i64: 1, 1, 128>}]} {
    %c0 = arith.constant 0 : index
    %c0_0 = arith.constant 0 : index
    %0 = vector.load %arg1[%c0, %c0_0] : memref<128x32xf32, #tpu.memory_space<vmem>>, vector<128x32xf32>
    %1 = arith.truncf %0 : vector<128x32xf32> to vector<128x32xbf16>
    %c0_1 = arith.constant 0 : index
    %c0_2 = arith.constant 0 : index
    %2 = vector.load %arg2[%c0_1, %c0_2] : memref<32x256xbf16, #tpu.memory_space<vmem>>, vector<32x256xbf16>
    %cst = arith.constant dense<0.000000e+00> : vector<128x256xf32>
    %3 = tpu.matmul %1, %2, %cst {dimension_numbers = #tpu.dot_dimension_numbers<[1], [0], [0], [1], [0, 0, 1, 1], [], []>} : vector<128x32xbf16>, vector<32x256xbf16>, vector<128x256xf32> -> vector<128x256xf32>
    %c0_3 = arith.constant 0 : index
    %c0_4 = arith.constant 0 : index
    %4 = vector.load %arg3[%c0_3, %c0_4] : memref<1x256xf32, #tpu.memory_space<vmem>>, vector<1x256xf32>
    %5 = vector.broadcast %4 : vector<1x256xf32> to vector<128x256xf32>
    %6 = arith.addf %3, %5 : vector<128x256xf32>
    %cst_5 = arith.constant 0.000000e+00 : f32
    %7 = vector.broadcast %cst_5 : f32 to vector<128x256xf32>
    %8 = arith.maximumf %6, %7 : vector<128x256xf32>
    %9 = arith.truncf %8 : vector<128x256xf32> to vector<128x256xbf16>
    %c0_6 = arith.constant 0 : index
    %c0_7 = arith.constant 0 : index
    %10 = vector.load %arg4[%c0_6, %c0_7] : memref<256x128xbf16, #tpu.memory_space<vmem>>, vector<256x128xbf16>
    %cst_8 = arith.constant dense<0.000000e+00> : vector<128x128xf32>
    %11 = tpu.matmul %9, %10, %cst_8 {dimension_numbers = #tpu.dot_dimension_numbers<[1], [0], [0], [1], [0, 0, 1, 1], [], []>} : vector<128x256xbf16>, vector<256x128xbf16>, vector<128x128xf32> -> vector<128x128xf32>
    %c0_9 = arith.constant 0 : index
    %c0_10 = arith.constant 0 : index
    %12 = vector.load %arg5[%c0_9, %c0_10] : memref<1x128xf32, #tpu.memory_space<vmem>>, vector<1x128xf32>
    %13 = vector.broadcast %12 : vector<1x128xf32> to vector<128x128xf32>
    %14 = arith.addf %11, %13 : vector<128x128xf32>
    %cst_11 = arith.constant 0.000000e+00 : f32
    %15 = vector.broadcast %cst_11 : f32 to vector<128x128xf32>
    %16 = arith.maximumf %14, %15 : vector<128x128xf32>
    %c0_12 = arith.constant 0 : index
    %c0_13 = arith.constant 0 : index
    %17 = vector.load %arg6[%c0_12, %c0_13] : memref<1x128xf32, #tpu.memory_space<vmem>>, vector<1x128xf32>
    %18 = vector.broadcast %17 : vector<1x128xf32> to vector<128x128xf32>
    %19 = arith.mulf %16, %18 : vector<128x128xf32>
    %cst_14 = arith.constant dense<0.000000e+00> : vector<128xf32>
    %20 = vector.multi_reduction <add>, %19, %cst_14 [1] : vector<128x128xf32> to vector<128xf32>
    %c0_15 = arith.constant 0 : index
    %21 = memref.load %arg7[%c0_15] : memref<1xf32, #tpu.memory_space<smem>>
    %22 = vector.broadcast %21 : f32 to vector<128xf32>
    %23 = arith.addf %20, %22 : vector<128xf32>
    %24 = vector.shape_cast %23 : vector<128xf32> to vector<1x1x128xf32>
    %c0_16 = arith.constant 0 : index
    %c0_17 = arith.constant 0 : index
    %c0_18 = arith.constant 0 : index
    %25 = vector.load %arg8[%c0_16, %c0_17, %c0_18] : memref<1x1x128xf32, #tpu.memory_space<vmem>>, vector<1x1x128xf32>
    tpu.vector_store %arg8[%c0_16, %c0_17, %c0_18], %24 {strides = array<i32>} : memref<1x1x128xf32, #tpu.memory_space<vmem>>, vector<1x1x128xf32>,
    return
  }
  func.func @transform_0(%arg0: i32) -> (i32, i32) {
    %c0_i32 = arith.constant 0 : i32
    %c0_i32_0 = arith.constant 0 : i32
    return %arg0, %c0_i32 : i32, i32
  }
  func.func @transform_1(%arg0: i32) -> (i32, i32) {
    %c0_i32 = arith.constant 0 : i32
    %c0_i32_0 = arith.constant 0 : i32
    %c0_i32_1 = arith.constant 0 : i32
    return %c0_i32, %c0_i32_0 : i32, i32
  }
  func.func @transform_2(%arg0: i32) -> (i32, i32) {
    %c0_i32 = arith.constant 0 : i32
    %c0_i32_0 = arith.constant 0 : i32
    %c0_i32_1 = arith.constant 0 : i32
    return %c0_i32, %c0_i32_0 : i32, i32
  }
  func.func @transform_3(%arg0: i32) -> (i32, i32) {
    %c0_i32 = arith.constant 0 : i32
    %c0_i32_0 = arith.constant 0 : i32
    %c0_i32_1 = arith.constant 0 : i32
    return %c0_i32, %c0_i32_0 : i32, i32
  }
  func.func @transform_4(%arg0: i32) -> (i32, i32) {
    %c0_i32 = arith.constant 0 : i32
    %c0_i32_0 = arith.constant 0 : i32
    %c0_i32_1 = arith.constant 0 : i32
    return %c0_i32, %c0_i32_0 : i32, i32
  }
  func.func @transform_5(%arg0: i32) -> (i32, i32) {
    %c0_i32 = arith.constant 0 : i32
    %c0_i32_0 = arith.constant 0 : i32
    %c0_i32_1 = arith.constant 0 : i32
    return %c0_i32, %c0_i32_0 : i32, i32
  }
  func.func @transform_6(%arg0: i32) -> i32 {
    %c0_i32 = arith.constant 0 : i32
    %c0_i32_0 = arith.constant 0 : i32
    return %c0_i32 : i32
  }
  func.func @transform_7(%arg0: i32) -> (i32, i32, i32) {
    %c0_i32 = arith.constant 0 : i32
    %c0_i32_0 = arith.constant 0 : i32
    %c0_i32_1 = arith.constant 0 : i32
    return %arg0, %c0_i32, %c0_i32_0 : i32, i32, i32
  }
}

module attributes {stable_mosaic.version = 11 : i64} {
  func.func @generator_kernel(%arg0: i32, %arg1: memref<128x32xf32, #tpu.memory_space<vmem>>, %arg2: memref<32x256xbf16, #tpu.memory_space<vmem>>, %arg3: memref<1x256xf32, #tpu.memory_space<vmem>>, %arg4: memref<256x128xbf16, #tpu.memory_space<vmem>>, %arg5: memref<1x128xf32, #tpu.memory_space<vmem>>, %arg6: memref<1x128xf32, #tpu.memory_space<vmem>>, %arg7: memref<1xf32, #tpu.memory_space<smem>>, %arg8: memref<1x1x128xf32, #tpu.memory_space<vmem>>) attributes {dimension_semantics = [#tpu.dimension_semantics<parallel>], iteration_bounds = array<i64: 1>, scalar_prefetch = 0 : i64, scratch_operands = 0 : i64, tpu.core_type = #tpu.core_type<tc>, window_params = [{transform_indices = @transform_0, window_bounds = array<i64: 128, 32>}, {pipeline_mode = #tpu.pipeline_mode<synchronous>, transform_indices = @transform_1, window_bounds = array<i64: 32, 256>}, {pipeline_mode = #tpu.pipeline_mode<synchronous>, transform_indices = @transform_2, window_bounds = array<i64: 1, 256>}, {pipeline_mode = #tpu.pipeline_mode<synchronous>, transform_indices = @transform_3, window_bounds = array<i64: 256, 128>}, {pipeline_mode = #tpu.pipeline_mode<synchronous>, transform_indices = @transform_4, window_bounds = array<i64: 1, 128>}, {pipeline_mode = #tpu.pipeline_mode<synchronous>, transform_indices = @transform_5, window_bounds = array<i64: 1, 128>}, {transform_indices = @transform_6, window_bounds = array<i64: 1>}, {transform_indices = @transform_7, window_bounds = array<i64: 1, 1, 128>}]} {
    %c0 = arith.constant 0 : index
    %c0_0 = arith.constant 0 : index
    %0 = vector.load %arg1[%c0, %c0_0] : memref<128x32xf32, #tpu.memory_space<vmem>>, vector<128x32xf32>
    %1 = arith.truncf %0 : vector<128x32xf32> to vector<128x32xbf16>
    %c0_1 = arith.constant 0 : index
    %c0_2 = arith.constant 0 : index
    %2 = vector.load %arg2[%c0_1, %c0_2] : memref<32x256xbf16, #tpu.memory_space<vmem>>, vector<32x256xbf16>
    %cst = arith.constant dense<0.000000e+00> : vector<128x256xf32>
    %3 = tpu.matmul %1, %2, %cst {dimension_numbers = #tpu.dot_dimension_numbers<[1], [0], [0], [1], [0, 0, 1, 1], [], []>} : vector<128x32xbf16>, vector<32x256xbf16>, vector<128x256xf32> -> vector<128x256xf32>
    %c0_3 = arith.constant 0 : index
    %c0_4 = arith.constant 0 : index
    %4 = vector.load %arg3[%c0_3, %c0_4] : memref<1x256xf32, #tpu.memory_space<vmem>>, vector<1x256xf32>
    %5 = vector.broadcast %4 : vector<1x256xf32> to vector<128x256xf32>
    %6 = arith.addf %3, %5 : vector<128x256xf32>
    %cst_5 = arith.constant 0.000000e+00 : f32
    %7 = vector.broadcast %cst_5 : f32 to vector<128x256xf32>
    %8 = arith.maximumf %6, %7 : vector<128x256xf32>
    %9 = arith.truncf %8 : vector<128x256xf32> to vector<128x256xbf16>
    %c0_6 = arith.constant 0 : index
    %c0_7 = arith.constant 0 : index
    %10 = vector.load %arg4[%c0_6, %c0_7] : memref<256x128xbf16, #tpu.memory_space<vmem>>, vector<256x128xbf16>
    %cst_8 = arith.constant dense<0.000000e+00> : vector<128x128xf32>
    %11 = tpu.matmul %9, %10, %cst_8 {dimension_numbers = #tpu.dot_dimension_numbers<[1], [0], [0], [1], [0, 0, 1, 1], [], []>} : vector<128x256xbf16>, vector<256x128xbf16>, vector<128x128xf32> -> vector<128x128xf32>
    %c0_9 = arith.constant 0 : index
    %c0_10 = arith.constant 0 : index
    %12 = vector.load %arg5[%c0_9, %c0_10] : memref<1x128xf32, #tpu.memory_space<vmem>>, vector<1x128xf32>
    %13 = vector.broadcast %12 : vector<1x128xf32> to vector<128x128xf32>
    %14 = arith.addf %11, %13 : vector<128x128xf32>
    %cst_11 = arith.constant 0.000000e+00 : f32
    %15 = vector.broadcast %cst_11 : f32 to vector<128x128xf32>
    %16 = arith.maximumf %14, %15 : vector<128x128xf32>
    %c0_12 = arith.constant 0 : index
    %c0_13 = arith.constant 0 : index
    %17 = vector.load %arg6[%c0_12, %c0_13] : memref<1x128xf32, #tpu.memory_space<vmem>>, vector<1x128xf32>
    %18 = vector.broadcast %17 : vector<1x128xf32> to vector<128x128xf32>
    %19 = arith.mulf %16, %18 : vector<128x128xf32>
    %cst_14 = arith.constant dense<0.000000e+00> : vector<128xf32>
    %20 = vector.multi_reduction <add>, %19, %cst_14 [1] : vector<128x128xf32> to vector<128xf32>
    %c0_15 = arith.constant 0 : index
    %21 = memref.load %arg7[%c0_15] : memref<1xf32, #tpu.memory_space<smem>>
    %22 = vector.broadcast %21 : f32 to vector<128xf32>
    %23 = arith.addf %20, %22 : vector<128xf32>
    %24 = vector.shape_cast %23 : vector<128xf32> to vector<1x1x128xf32>
    %c0_16 = arith.constant 0 : index
    %c0_17 = arith.constant 0 : index
    %c0_18 = arith.constant 0 : index
    %25 = vector.load %arg8[%c0_16, %c0_17, %c0_18] : memref<1x1x128xf32, #tpu.memory_space<vmem>>, vector<1x1x128xf32>
    tpu.vector_store %arg8[%c0_16, %c0_17, %c0_18], %24 {strides = array<i32>} : memref<1x1x128xf32, #tpu.memory_space<vmem>>, vector<1x1x128xf32>,
    return
  }
  func.func @transform_0(%arg0: i32) -> (i32, i32) {
    %c0_i32 = arith.constant 0 : i32
    %c0_i32_0 = arith.constant 0 : i32
    return %arg0, %c0_i32 : i32, i32
  }
  func.func @transform_1(%arg0: i32) -> (i32, i32) {
    %c0_i32 = arith.constant 0 : i32
    %c0_i32_0 = arith.constant 0 : i32
    %c0_i32_1 = arith.constant 0 : i32
    return %c0_i32, %c0_i32_0 : i32, i32
  }
  func.func @transform_2(%arg0: i32) -> (i32, i32) {
    %c0_i32 = arith.constant 0 : i32
    %c0_i32_0 = arith.constant 0 : i32
    %c0_i32_1 = arith.constant 0 : i32
    return %c0_i32, %c0_i32_0 : i32, i32
  }
  func.func @transform_3(%arg0: i32) -> (i32, i32) {
    %c0_i32 = arith.constant 0 : i32
    %c0_i32_0 = arith.constant 0 : i32
    %c0_i32_1 = arith.constant 0 : i32
    return %c0_i32, %c0_i32_0 : i32, i32
  }
  func.func @transform_4(%arg0: i32) -> (i32, i32) {
    %c0_i32 = arith.constant 0 : i32
    %c0_i32_0 = arith.constant 0 : i32
    %c0_i32_1 = arith.constant 0 : i32
    return %c0_i32, %c0_i32_0 : i32, i32
  }
  func.func @transform_5(%arg0: i32) -> (i32, i32) {
    %c0_i32 = arith.constant 0 : i32
    %c0_i32_0 = arith.constant 0 : i32
    %c0_i32_1 = arith.constant 0 : i32
    return %c0_i32, %c0_i32_0 : i32, i32
  }
  func.func @transform_6(%arg0: i32) -> i32 {
    %c0_i32 = arith.constant 0 : i32
    %c0_i32_0 = arith.constant 0 : i32
    return %c0_i32 : i32
  }
  func.func @transform_7(%arg0: i32) -> (i32, i32, i32) {
    %c0_i32 = arith.constant 0 : i32
    %c0_i32_0 = arith.constant 0 : i32
    %c0_i32_1 = arith.constant 0 : i32
    return %arg0, %c0_i32, %c0_i32_0 : i32, i32, i32
  }
}

</mosaic_0001>

<llo_original>
// kernel: tpu_custom_call.1
$region0: #{tpu_custom_call.1}
  #allocation0 [shape = 'u32[]', space=smem, size = 0x4, offset = 0x4, fixed_abs, tag = 'smem constant byte address 0x4 - core index']
  #allocation1 [shape = 'u32[144,128]{1,0:T(1,128)}', space=vmem, size = 0x12000, scoped, tag = 'internal scratch']
  #allocation2 [shape = 'f32[1]{0:T(128)S(6)}', space=smem, size = 0x200, scoped, tag = 'scoped memory for tpu_custom_call.1']
  %s0 = inlined_call_operand.vmem [shape: f32[128,32], index: 0, kind: input, shape index: {}]
  %s1 = inlined_call_operand.vmem [shape: bf16[32,256], index: 1, kind: input, shape index: {}]
  %s2 = inlined_call_operand.vmem [shape: f32[1,256], index: 2, kind: input, shape index: {}]
  %s3 = inlined_call_operand.vmem [shape: bf16[256,128], index: 3, kind: input, shape index: {}]
  %s4 = inlined_call_operand.vmem [shape: f32[1,128], index: 4, kind: input, shape index: {}]
  %s5 = inlined_call_operand.vmem [shape: f32[1,128], index: 5, kind: input, shape index: {}]
  %s6 = inlined_call_operand.<no memory space> [shape: f32[1], index: 6, kind: input, shape index: {}]
  %s7 = inlined_call_operand.hbm [shape: f32[1,1,128], index: 7, kind: output, shape index: {}]
  %s8 = sld [smem:[#allocation0]]
  $region38: #{tpu_custom_call.1} parent=0
    _
  %s10 = ssub.s32 1, %s8
  %s11 = scalar_select 0, %s10, %s8
  %12 = sst [smem:[#allocation2]] %s6
  $region1: #{tpu_custom_call.1} parent=0
    #allocation3 [shape = 'u8[512]{0}', space=vmem, size = 0x400, scoped, tag = 'output window, operand 0, single buffered']
    #allocation4 [shape = 's32[1]{0}', space=sflag, size = 0x4, scoped, tag = 'scoped memory for tpu_custom_call.1']
    %13 = vsyncpa [#allocation4], 0
    // Predicated region
    $region2: #{tpu_custom_call.1} parent=1 // pred_check
      _
    $region3: #{tpu_custom_call.1} parent=1 // pred_check_branch
      %15 = sbr.rel (0) target = $region5
    $region4: #{tpu_custom_call.1} parent=1 // pred_region
      _
    $region5: #{tpu_custom_call.1} parent=1 // pred_fallthru
      _
    // Predicated region
    $region6: #{tpu_custom_call.1} parent=1 // pred_check
      _
    $region7: #{tpu_custom_call.1} parent=1 // pred_check_branch
      %17 = sbr.rel (0) target = $region9
    $region8: #{tpu_custom_call.1} parent=1 // pred_region
      _
    $region9: #{tpu_custom_call.1} parent=1 // pred_fallthru
      _
    // Predicated region
    $region10: #{tpu_custom_call.1} parent=1 // pred_check
      _
    $region11: #{tpu_custom_call.1} parent=1 // pred_check_branch
      %19 = sbr.rel (0) target = $region13
    $region12: #{tpu_custom_call.1} parent=1 // pred_region
      _
    $region13: #{tpu_custom_call.1} parent=1 // pred_fallthru
      _
    // Predicated region
    $region14: #{tpu_custom_call.1} parent=1 // pred_check
      _
    $region15: #{tpu_custom_call.1} parent=1 // pred_check_branch
      %21 = sbr.rel (0) target = $region17
    $region16: #{tpu_custom_call.1} parent=1 // pred_region
      _
    $region17: #{tpu_custom_call.1} parent=1 // pred_fallthru
      _
    // Predicated region
    $region18: #{tpu_custom_call.1} parent=1 // pred_check
      _
    $region19: #{tpu_custom_call.1} parent=1 // pred_check_branch
      %23 = sbr.rel (0) target = $region21
    $region20: #{tpu_custom_call.1} parent=1 // pred_region
      _
    $region21: #{tpu_custom_call.1} parent=1 // pred_fallthru
      _
    // Predicated region
    $region22: #{tpu_custom_call.1} parent=1 // pred_check
      _
    $region23: #{tpu_custom_call.1} parent=1 // pred_check_branch
      %25 = sbr.rel (0) target = $region25
    $region24: #{tpu_custom_call.1} parent=1 // pred_region
      _
    $region25: #{tpu_custom_call.1} parent=1 // pred_fallthru
      _
    // Predicated region
    $region26: #{tpu_custom_call.1} parent=1 // pred_check
      _
    $region27: #{tpu_custom_call.1} parent=1 // pred_check_branch
      %27 = sbr.rel (0) target = $region29
    $region28: #{tpu_custom_call.1} parent=1 // pred_region
      _
    $region29: #{tpu_custom_call.1} parent=1 // pred_fallthru
      _
    %v29 = vld [vmem:[%s0] sm:$0xff]
    %v30 = vld [vmem:[%s0 + $0x8] sm:$0xff]
    %v31 = vld [vmem:[%s0 + $0x10] sm:$0xff]
    %v32 = vld [vmem:[%s0 + $0x18] sm:$0xff]
    %v33 = vld [vmem:[%s0 + $0x20] sm:$0xff]
    %v34 = vld [vmem:[%s0 + $0x28] sm:$0xff]
    %v35 = vld [vmem:[%s0 + $0x30] sm:$0xff]
    %v36 = vld [vmem:[%s0 + $0x38] sm:$0xff]
    %v37 = vld [vmem:[%s0 + $0x40] sm:$0xff]
    %v38 = vld [vmem:[%s0 + $0x48] sm:$0xff]
    %v39 = vld [vmem:[%s0 + $0x50] sm:$0xff]
    %v40 = vld [vmem:[%s0 + $0x58] sm:$0xff]
    %v41 = vld [vmem:[%s0 + $0x60] sm:$0xff]
    %v42 = vld [vmem:[%s0 + $0x68] sm:$0xff]
    %v43 = vld [vmem:[%s0 + $0x70] sm:$0xff]
    %v44 = vld [vmem:[%s0 + $0x78] sm:$0xff]
    %v45 = vpack.c.bf16 %v30, %v29
    %v46 = vpack.c.bf16 %v32, %v31
    %v47 = vpack.c.bf16 %v34, %v33
    %v48 = vpack.c.bf16 %v36, %v35
    %v49 = vpack.c.bf16 %v38, %v37
    %v50 = vpack.c.bf16 %v40, %v39
    %v51 = vpack.c.bf16 %v42, %v41
    %v52 = vpack.c.bf16 %v44, %v43
    %v53 = vld [vmem:[%s1] sm:$0xff]
    %v54 = vld [vmem:[%s1 + $0x8] sm:$0xff]
    %v55 = vld [vmem:[%s1 + $0x10] sm:$0xff]
    %v56 = vld [vmem:[%s1 + $0x18] sm:$0xff]
    %v57 = vld [vmem:[%s2] sm:$0x3]
    %v59 = vlaneseq
    %v60 = vshrl.u32 %v59, 7
    %v61 = vsub.s32 0, %v60
    %v62 = vrot.slane %v57, %v61
    %v63 = vlaneseq
    %v64 = vshrl.u32 %v63, 7
    %v65 = vsub.s32 1, %v64
    %v66 = vrot.slane %v57, %v65
    %v73 = vunpack.c.l.b16 %v53
    %v74 = vunpack.c.h.b16 %v53
    %v75 = vunpack.c.l.b16 %v54
    %v76 = vunpack.c.h.b16 %v54
    %v77 = vunpack.c.l.b16 %v55
    %v78 = vunpack.c.h.b16 %v55
    %v79 = vunpack.c.l.b16 %v56
    %v80 = vunpack.c.h.b16 %v56
    %v81 = vpack.c.b16 %v75, %v73
    %v82 = vpack.c.b16 %v76, %v74
    %v83 = vpack.c.b16 %v79, %v77
    %v84 = vpack.c.b16 %v80, %v78
    %vm89 = vcmask 261120
    %v91 = vsel %vm89, %v45, 0
    %v94 = vsel %vm89, %v46, 0
    %v97 = vsel %vm89, %v47, 0
    %v100 = vsel %vm89, %v48, 0
    %v103 = vsel %vm89, %v49, 0
    %v106 = vsel %vm89, %v50, 0
    %v109 = vsel %vm89, %v51, 0
    %v112 = vsel %vm89, %v52, 0
    %114 = vmatprep.subr.bf16.mxu0 %v82
    %115 = vmatpush1.bf16.msra.mxu0 %v81
    %116 = vmatprep.subr.bf16.mxu0 %v84
    %117 = vmatpush1.bf16.msra.mxu0 %v83
    %118 = vmatprep.subr.bf16.mxu0 0
    %119 = vmatpush1.bf16.msra.mxu0 0
    %120 = vmatprep.subr.bf16.mxu0 0
    %121 = vmatpush1.bf16.msra.mxu0 0
    %122 = vmatprep.subr.bf16.mxu0 0
    %123 = vmatpush1.bf16.msra.mxu0 0
    %124 = vmatprep.subr.bf16.mxu0 0
    %125 = vmatpush1.bf16.msra.mxu0 0
    %126 = vmatprep.subr.bf16.mxu0 0
    %127 = vmatpush1.bf16.msra.mxu0 0
    %128 = vmatprep.subr.bf16.mxu0 0
    %129 = vmatpush1.bf16.msra.mxu0 0
    %130 = vmatprep.subr.bf16.mxu0 0
    %131 = vmatpush1.bf16.msra.mxu0 0
    %132 = vmatprep.subr.bf16.mxu0 0
    %133 = vmatpush1.bf16.msra.mxu0 0
    %134 = vmatprep.subr.bf16.mxu0 0
    %135 = vmatpush1.bf16.msra.mxu0 0
    %136 = vmatprep.subr.bf16.mxu0 0
    %137 = vmatpush1.bf16.msra.mxu0 0
    %138 = vmatprep.subr.bf16.mxu0 0
    %139 = vmatpush1.bf16.msra.mxu0 0
    %140 = vmatprep.subr.bf16.mxu0 0
    %141 = vmatpush1.bf16.msra.mxu0 0
    %142 = vmatprep.subr.bf16.mxu0 0
    %143 = vmatpush1.bf16.msra.mxu0 0
    %144 = vmatprep.subr.bf16.mxu0 0
    %145 = vmatpush1.bf16.msra.mxu0 0
    %146 = vmatprep.mubr.bf16.mxu0 0
    %147 = vmatmul.mubr.bf16.gmra.mrb[0].mxu0 %v91
    %v148 = vpop.f32.mrb[0].mxu0
    %v149 = vadd.f32 %v62, %v148
    %v150 = vpop.f32.mrb[0].mxu0
    %v151 = vadd.f32 %v66, %v150
    %v152 = vpop.f32.mrb[0].mxu0
    %v153 = vadd.f32 %v62, %v152
    %v154 = vpop.f32.mrb[0].mxu0
    %v155 = vadd.f32 %v66, %v154
    %156 = vmatprep.mubr.bf16.mxu0 0
    %157 = vmatmul.mubr.bf16.gmra.mrb[0].mxu0 %v94
    %v158 = vpop.f32.mrb[0].mxu0
    %v159 = vadd.f32 %v62, %v158
    %v160 = vpop.f32.mrb[0].mxu0
    %v161 = vadd.f32 %v66, %v160
    %v162 = vpop.f32.mrb[0].mxu0
    %v163 = vadd.f32 %v62, %v162
    %v164 = vpop.f32.mrb[0].mxu0
    %v165 = vadd.f32 %v66, %v164
    %166 = vmatprep.mubr.bf16.mxu0 0
    %167 = vmatmul.mubr.bf16.gmra.mrb[0].mxu0 %v97
    %v168 = vpop.f32.mrb[0].mxu0
    %v169 = vadd.f32 %v62, %v168
    %v170 = vpop.f32.mrb[0].mxu0
    %v171 = vadd.f32 %v66, %v170
    %v172 = vpop.f32.mrb[0].mxu0
    %v173 = vadd.f32 %v62, %v172
    %v174 = vpop.f32.mrb[0].mxu0
    %v175 = vadd.f32 %v66, %v174
    %176 = vmatprep.mubr.bf16.mxu0 0
    %177 = vmatmul.mubr.bf16.gmra.mrb[0].mxu0 %v100
    %v178 = vpop.f32.mrb[0].mxu0
    %v179 = vadd.f32 %v62, %v178
    %v180 = vpop.f32.mrb[0].mxu0
    %v181 = vadd.f32 %v66, %v180
    %v182 = vpop.f32.mrb[0].mxu0
    %v183 = vadd.f32 %v62, %v182
    %v184 = vpop.f32.mrb[0].mxu0
    %v185 = vadd.f32 %v66, %v184
    %186 = vmatprep.mubr.bf16.mxu0 0
    %187 = vmatmul.mubr.bf16.gmra.mrb[0].mxu0 %v103
    %v188 = vpop.f32.mrb[0].mxu0
    %v189 = vadd.f32 %v62, %v188
    %v190 = vpop.f32.mrb[0].mxu0
    %v191 = vadd.f32 %v66, %v190
    %v192 = vpop.f32.mrb[0].mxu0
    %v193 = vadd.f32 %v62, %v192
    %v194 = vpop.f32.mrb[0].mxu0
    %v195 = vadd.f32 %v66, %v194
    %196 = vmatprep.mubr.bf16.mxu0 0
    %197 = vmatmul.mubr.bf16.gmra.mrb[0].mxu0 %v106
    %v198 = vpop.f32.mrb[0].mxu0
    %v199 = vadd.f32 %v62, %v198
    %v200 = vpop.f32.mrb[0].mxu0
    %v201 = vadd.f32 %v66, %v200
    %v202 = vpop.f32.mrb[0].mxu0
    %v203 = vadd.f32 %v62, %v202
    %v204 = vpop.f32.mrb[0].mxu0
    %v205 = vadd.f32 %v66, %v204
    %206 = vmatprep.mubr.bf16.mxu0 0
    %207 = vmatmul.mubr.bf16.gmra.mrb[0].mxu0 %v109
    %v208 = vpop.f32.mrb[0].mxu0
    %v209 = vadd.f32 %v62, %v208
    %v210 = vpop.f32.mrb[0].mxu0
    %v211 = vadd.f32 %v66, %v210
    %v212 = vpop.f32.mrb[0].mxu0
    %v213 = vadd.f32 %v62, %v212
    %v214 = vpop.f32.mrb[0].mxu0
    %v215 = vadd.f32 %v66, %v214
    %216 = vmatprep.mubr.bf16.mxu0 0
    %217 = vmatmul.mubr.bf16.gmra.mrb[0].mxu0 %v112
    %v218 = vpop.f32.mrb[0].mxu0
    %v219 = vadd.f32 %v62, %v218
    %v220 = vpop.f32.mrb[0].mxu0
    %v221 = vadd.f32 %v66, %v220
    %v222 = vpop.f32.mrb[0].mxu0
    %v223 = vadd.f32 %v62, %v222
    %v224 = vpop.f32.mrb[0].mxu0
    %v225 = vadd.f32 %v66, %v224
    %226 = vdwg.mxu0
    %v227 = vmax.f32 %v149, 0.0
    %v228 = vmax.f32 %v151, 0.0
    %v229 = vmax.f32 %v153, 0.0
    %v230 = vmax.f32 %v155, 0.0
    %v231 = vmax.f32 %v159, 0.0
    %v232 = vmax.f32 %v161, 0.0
    %v233 = vmax.f32 %v163, 0.0
    %v234 = vmax.f32 %v165, 0.0
    %v235 = vmax.f32 %v169, 0.0
    %v236 = vmax.f32 %v171, 0.0
    %v237 = vmax.f32 %v173, 0.0
    %v238 = vmax.f32 %v175, 0.0
    %v239 = vmax.f32 %v179, 0.0
    %v240 = vmax.f32 %v181, 0.0
    %v241 = vmax.f32 %v183, 0.0
    %v242 = vmax.f32 %v185, 0.0
    %v243 = vmax.f32 %v189, 0.0
    %v244 = vmax.f32 %v191, 0.0
    %v245 = vmax.f32 %v193, 0.0
    %v246 = vmax.f32 %v195, 0.0
    %v247 = vmax.f32 %v199, 0.0
    %v248 = vmax.f32 %v201, 0.0
    %v249 = vmax.f32 %v203, 0.0
    %v250 = vmax.f32 %v205, 0.0
    %v251 = vmax.f32 %v209, 0.0
    %v252 = vmax.f32 %v211, 0.0
    %v253 = vmax.f32 %v213, 0.0
    %v254 = vmax.f32 %v215, 0.0
    %v255 = vmax.f32 %v219, 0.0
    %v256 = vmax.f32 %v221, 0.0
    %v257 = vmax.f32 %v223, 0.0
    %v258 = vmax.f32 %v225, 0.0
    %v259 = vpack.c.bf16 %v229, %v227
    %v260 = vpack.c.bf16 %v230, %v228
    %v261 = vpack.c.bf16 %v233, %v231
    %v262 = vpack.c.bf16 %v234, %v232
    %v263 = vpack.c.bf16 %v237, %v235
    %v264 = vpack.c.bf16 %v238, %v236
    %v265 = vpack.c.bf16 %v241, %v239
    %v266 = vpack.c.bf16 %v242, %v240
    %v267 = vpack.c.bf16 %v245, %v243
    %v268 = vpack.c.bf16 %v246, %v244
    %v269 = vpack.c.bf16 %v249, %v247
    %v270 = vpack.c.bf16 %v250, %v248
    %v271 = vpack.c.bf16 %v253, %v251
    %v272 = vpack.c.bf16 %v254, %v252
    %v273 = vpack.c.bf16 %v257, %v255
    %v274 = vpack.c.bf16 %v258, %v256
    %v275 = vld [vmem:[%s3] sm:$0xf]
    %v276 = vld [vmem:[%s3 + $0x4] sm:$0xf]
    %v277 = vld [vmem:[%s3 + $0x8] sm:$0xf]
    %v278 = vld [vmem:[%s3 + $0xc] sm:$0xf]
    %v279 = vld [vmem:[%s3 + $0x10] sm:$0xf]
    %v280 = vld [vmem:[%s3 + $0x14] sm:$0xf]
    %v281 = vld [vmem:[%s3 + $0x18] sm:$0xf]
    %v282 = vld [vmem:[%s3 + $0x1c] sm:$0xf]
    %v283 = vld [vmem:[%s3 + $0x20] sm:$0xf]
    %v284 = vld [vmem:[%s3 + $0x24] sm:$0xf]
    %v285 = vld [vmem:[%s3 + $0x28] sm:$0xf]
    %v286 = vld [vmem:[%s3 + $0x2c] sm:$0xf]
    %v287 = vld [vmem:[%s3 + $0x30] sm:$0xf]
    %v288 = vld [vmem:[%s3 + $0x34] sm:$0xf]
    %v289 = vld [vmem:[%s3 + $0x38] sm:$0xf]
    %v290 = vld [vmem:[%s3 + $0x3c] sm:$0xf]
    %v291 = vld [vmem:[%s3 + $0x40] sm:$0xf]
    %v292 = vld [vmem:[%s3 + $0x44] sm:$0xf]
    %v293 = vld [vmem:[%s3 + $0x48] sm:$0xf]
    %v294 = vld [vmem:[%s3 + $0x4c] sm:$0xf]
    %v295 = vld [vmem:[%s3 + $0x50] sm:$0xf]
    %v296 = vld [vmem:[%s3 + $0x54] sm:$0xf]
    %v297 = vld [vmem:[%s3 + $0x58] sm:$0xf]
    %v298 = vld [vmem:[%s3 + $0x5c] sm:$0xf]
    %v299 = vld [vmem:[%s3 + $0x60] sm:$0xf]
    %v300 = vld [vmem:[%s3 + $0x64] sm:$0xf]
    %v301 = vld [vmem:[%s3 + $0x68] sm:$0xf]
    %v302 = vld [vmem:[%s3 + $0x6c] sm:$0xf]
    %v303 = vld [vmem:[%s3 + $0x70] sm:$0xf]
    %v304 = vld [vmem:[%s3 + $0x74] sm:$0xf]
    %v305 = vld [vmem:[%s3 + $0x78] sm:$0xf]
    %v306 = vld [vmem:[%s3 + $0x7c] sm:$0xf]
    %v307 = vld [vmem:[%s4] sm:$0x1]
    %v309 = vlaneseq
    %v310 = vshrl.u32 %v309, 7
    %v311 = vsub.s32 0, %v310
    %v312 = vrot.slane %v307, %v311
    %v346 = vunpack.c.l.b16 %v275
    %v347 = vunpack.c.l.b16 %v276
    %v348 = vunpack.c.l.b16 %v277
    %v349 = vunpack.c.l.b16 %v278
    %v350 = vunpack.c.l.b16 %v279
    %v351 = vunpack.c.l.b16 %v280
    %v352 = vunpack.c.l.b16 %v281
    %v353 = vunpack.c.l.b16 %v282
    %v354 = vunpack.c.l.b16 %v283
    %v355 = vunpack.c.l.b16 %v284
    %v356 = vunpack.c.l.b16 %v285
    %v357 = vunpack.c.l.b16 %v286
    %v358 = vunpack.c.l.b16 %v287
    %v359 = vunpack.c.l.b16 %v288
    %v360 = vunpack.c.l.b16 %v289
    %v361 = vunpack.c.l.b16 %v290
    %v362 = vunpack.c.l.b16 %v291
    %v363 = vunpack.c.l.b16 %v292
    %v364 = vunpack.c.l.b16 %v293
    %v365 = vunpack.c.l.b16 %v294
    %v366 = vunpack.c.l.b16 %v295
    %v367 = vunpack.c.l.b16 %v296
    %v368 = vunpack.c.l.b16 %v297
    %v369 = vunpack.c.l.b16 %v298
    %v370 = vunpack.c.l.b16 %v299
    %v371 = vunpack.c.l.b16 %v300
    %v372 = vunpack.c.l.b16 %v301
    %v373 = vunpack.c.l.b16 %v302
    %v374 = vunpack.c.l.b16 %v303
    %v375 = vunpack.c.l.b16 %v304
    %v376 = vunpack.c.l.b16 %v305
    %v377 = vunpack.c.l.b16 %v306
    %v378 = vpack.c.b16 %v347, %v346
    %v379 = vpack.c.b16 %v349, %v348
    %v380 = vpack.c.b16 %v351, %v350
    %v381 = vpack.c.b16 %v353, %v352
    %v382 = vpack.c.b16 %v355, %v354
    %v383 = vpack.c.b16 %v357, %v356
    %v384 = vpack.c.b16 %v359, %v358
    %v385 = vpack.c.b16 %v361, %v360
    %v386 = vpack.c.b16 %v363, %v362
    %v387 = vpack.c.b16 %v365, %v364
    %v388 = vpack.c.b16 %v367, %v366
    %v389 = vpack.c.b16 %v369, %v368
    %v390 = vpack.c.b16 %v371, %v370
    %v391 = vpack.c.b16 %v373, %v372
    %v392 = vpack.c.b16 %v375, %v374
    %v393 = vpack.c.b16 %v377, %v376
    %410 = vmatprep.subr.bf16.mxu0 0
    %411 = vmatpush1.bf16.msra.mxu0 %v378
    %412 = vmatprep.subr.bf16.mxu0 0
    %413 = vmatpush1.bf16.msra.mxu0 %v379
    %414 = vmatprep.subr.bf16.mxu0 0
    %415 = vmatpush1.bf16.msra.mxu0 %v380
    %416 = vmatprep.subr.bf16.mxu0 0
    %417 = vmatpush1.bf16.msra.mxu0 %v381
    %418 = vmatprep.subr.bf16.mxu0 0
    %419 = vmatpush1.bf16.msra.mxu0 %v382
    %420 = vmatprep.subr.bf16.mxu0 0
    %421 = vmatpush1.bf16.msra.mxu0 %v383
    %422 = vmatprep.subr.bf16.mxu0 0
    %423 = vmatpush1.bf16.msra.mxu0 %v384
    %424 = vmatprep.subr.bf16.mxu0 0
    %425 = vmatpush1.bf16.msra.mxu0 %v385
    %426 = vmatprep.subr.bf16.mxu0 0
    %427 = vmatpush1.bf16.msra.mxu0 %v386
    %428 = vmatprep.subr.bf16.mxu0 0
    %429 = vmatpush1.bf16.msra.mxu0 %v387
    %430 = vmatprep.subr.bf16.mxu0 0
    %431 = vmatpush1.bf16.msra.mxu0 %v388
    %432 = vmatprep.subr.bf16.mxu0 0
    %433 = vmatpush1.bf16.msra.mxu0 %v389
    %434 = vmatprep.subr.bf16.mxu0 0
    %435 = vmatpush1.bf16.msra.mxu0 %v390
    %436 = vmatprep.subr.bf16.mxu0 0
    %437 = vmatpush1.bf16.msra.mxu0 %v391
    %438 = vmatprep.subr.bf16.mxu0 0
    %439 = vmatpush1.bf16.msra.mxu0 %v392
    %440 = vmatprep.subr.bf16.mxu0 0
    %441 = vmatpush1.bf16.msra.mxu0 %v393
    %442 = vmatprep.mubr.bf16.mxu0 %v260
    %443 = vmatmul.mubr.bf16.gmra.mrb[0].mxu0 %v259
    %v444 = vpop.f32.mrb[0].mxu0
    %v445 = vadd.f32 %v312, %v444
    %v446 = vpop.f32.mrb[0].mxu0
    %v447 = vpop.f32.mrb[0].mxu0
    %v448 = vadd.f32 %v312, %v447
    %v449 = vpop.f32.mrb[0].mxu0
    %450 = vmatprep.mubr.bf16.mxu0 %v262
    %451 = vmatmul.mubr.bf16.gmra.mrb[0].mxu0 %v261
    %v452 = vpop.f32.mrb[0].mxu0
    %v453 = vadd.f32 %v312, %v452
    %v454 = vpop.f32.mrb[0].mxu0
    %v455 = vpop.f32.mrb[0].mxu0
    %v456 = vadd.f32 %v312, %v455
    %v457 = vpop.f32.mrb[0].mxu0
    %458 = vmatprep.mubr.bf16.mxu0 %v264
    %459 = vmatmul.mubr.bf16.gmra.mrb[0].mxu0 %v263
    %v460 = vpop.f32.mrb[0].mxu0
    %v461 = vadd.f32 %v312, %v460
    %v462 = vpop.f32.mrb[0].mxu0
    %v463 = vpop.f32.mrb[0].mxu0
    %v464 = vadd.f32 %v312, %v463
    %v465 = vpop.f32.mrb[0].mxu0
    %466 = vmatprep.mubr.bf16.mxu0 %v266
    %467 = vmatmul.mubr.bf16.gmra.mrb[0].mxu0 %v265
    %v468 = vpop.f32.mrb[0].mxu0
    %v469 = vadd.f32 %v312, %v468
    %v470 = vpop.f32.mrb[0].mxu0
    %v471 = vpop.f32.mrb[0].mxu0
    %v472 = vadd.f32 %v312, %v471
    %v473 = vpop.f32.mrb[0].mxu0
    %474 = vmatprep.mubr.bf16.mxu0 %v268
    %475 = vmatmul.mubr.bf16.gmra.mrb[0].mxu0 %v267
    %v476 = vpop.f32.mrb[0].mxu0
    %v477 = vadd.f32 %v312, %v476
    %v478 = vpop.f32.mrb[0].mxu0
    %v479 = vpop.f32.mrb[0].mxu0
    %v480 = vadd.f32 %v312, %v479
    %v481 = vpop.f32.mrb[0].mxu0
    %482 = vmatprep.mubr.bf16.mxu0 %v270
    %483 = vmatmul.mubr.bf16.gmra.mrb[0].mxu0 %v269
    %v484 = vpop.f32.mrb[0].mxu0
    %v485 = vadd.f32 %v312, %v484
    %v486 = vpop.f32.mrb[0].mxu0
    %v487 = vpop.f32.mrb[0].mxu0
    %v488 = vadd.f32 %v312, %v487
    %v489 = vpop.f32.mrb[0].mxu0
    %490 = vmatprep.mubr.bf16.mxu0 %v272
    %491 = vmatmul.mubr.bf16.gmra.mrb[0].mxu0 %v271
    %v492 = vpop.f32.mrb[0].mxu0
    %v493 = vadd.f32 %v312, %v492
    %v494 = vpop.f32.mrb[0].mxu0
    %v495 = vpop.f32.mrb[0].mxu0
    %v496 = vadd.f32 %v312, %v495
    %v497 = vpop.f32.mrb[0].mxu0
    %498 = vmatprep.mubr.bf16.mxu0 %v274
    %499 = vmatmul.mubr.bf16.gmra.mrb[0].mxu0 %v273
    %v500 = vpop.f32.mrb[0].mxu0
    %v501 = vadd.f32 %v312, %v500
    %v502 = vpop.f32.mrb[0].mxu0
    %v503 = vpop.f32.mrb[0].mxu0
    %v504 = vadd.f32 %v312, %v503
    %v505 = vpop.f32.mrb[0].mxu0
    %506 = vdwg.mxu0
    %v507 = vmax.f32 %v445, 0.0
    %v508 = vmax.f32 %v448, 0.0
    %v509 = vmax.f32 %v453, 0.0
    %v510 = vmax.f32 %v456, 0.0
    %v511 = vmax.f32 %v461, 0.0
    %v512 = vmax.f32 %v464, 0.0
    %v513 = vmax.f32 %v469, 0.0
    %v514 = vmax.f32 %v472, 0.0
    %v515 = vmax.f32 %v477, 0.0
    %v516 = vmax.f32 %v480, 0.0
    %v517 = vmax.f32 %v485, 0.0
    %v518 = vmax.f32 %v488, 0.0
    %v519 = vmax.f32 %v493, 0.0
    %v520 = vmax.f32 %v496, 0.0
    %v521 = vmax.f32 %v501, 0.0
    %v522 = vmax.f32 %v504, 0.0
    %v523 = vld [vmem:[%s5] sm:$0x1]
    %v525 = vlaneseq
    %v526 = vshrl.u32 %v525, 7
    %v527 = vsub.s32 0, %v526
    %v528 = vrot.slane %v523, %v527
    %v530 = vmul.f32 %v507, %v528
    %v531 = vmul.f32 %v508, %v528
    %v532 = vmul.f32 %v509, %v528
    %v533 = vmul.f32 %v510, %v528
    %v534 = vmul.f32 %v511, %v528
    %v535 = vmul.f32 %v512, %v528
    %v536 = vmul.f32 %v513, %v528
    %v537 = vmul.f32 %v514, %v528
    %v538 = vmul.f32 %v515, %v528
    %v539 = vmul.f32 %v516, %v528
    %v540 = vmul.f32 %v517, %v528
    %v541 = vmul.f32 %v518, %v528
    %v542 = vmul.f32 %v519, %v528
    %v543 = vmul.f32 %v520, %v528
    %v544 = vmul.f32 %v521, %v528
    %v545 = vmul.f32 %v522, %v528
    %546 = vadd.xlane.f32.xlu0 %v530
    %v547 = vpop.xlane.xlu0 %546
    %548 = vadd.xlane.f32.xlu0 %v531
    %v549 = vpop.xlane.xlu0 %548
    %550 = vadd.xlane.f32.xlu0 %v532
    %v551 = vpop.xlane.xlu0 %550
    %552 = vadd.xlane.f32.xlu0 %v533
    %v553 = vpop.xlane.xlu0 %552
    %554 = vadd.xlane.f32.xlu0 %v534
    %v555 = vpop.xlane.xlu0 %554
    %556 = vadd.xlane.f32.xlu0 %v535
    %v557 = vpop.xlane.xlu0 %556
    %558 = vadd.xlane.f32.xlu0 %v536
    %v559 = vpop.xlane.xlu0 %558
    %560 = vadd.xlane.f32.xlu0 %v537
    %v561 = vpop.xlane.xlu0 %560
    %562 = vadd.xlane.f32.xlu0 %v538
    %v563 = vpop.xlane.xlu0 %562
    %564 = vadd.xlane.f32.xlu0 %v539
    %v565 = vpop.xlane.xlu0 %564
    %566 = vadd.xlane.f32.xlu0 %v540
    %v567 = vpop.xlane.xlu0 %566
    %568 = vadd.xlane.f32.xlu0 %v541
    %v569 = vpop.xlane.xlu0 %568
    %570 = vadd.xlane.f32.xlu0 %v542
    %v571 = vpop.xlane.xlu0 %570
    %572 = vadd.xlane.f32.xlu0 %v543
    %v573 = vpop.xlane.xlu0 %572
    %574 = vadd.xlane.f32.xlu0 %v544
    %v575 = vpop.xlane.xlu0 %574
    %576 = vadd.xlane.f32.xlu0 %v545
    %v577 = vpop.xlane.xlu0 %576
    %s578 = sld [smem:[#allocation2]]
    %v579 = vstv %s578
    %v580 = vadd.f32 %v547, %v579
    %v581 = vadd.f32 %v549, %v579
    %v582 = vadd.f32 %v551, %v579
    %v583 = vadd.f32 %v553, %v579
    %v584 = vadd.f32 %v555, %v579
    %v585 = vadd.f32 %v557, %v579
    %v586 = vadd.f32 %v559, %v579
    %v587 = vadd.f32 %v561, %v579
    %v588 = vadd.f32 %v563, %v579
    %v589 = vadd.f32 %v565, %v579
    %v590 = vadd.f32 %v567, %v579
    %v591 = vadd.f32 %v569, %v579
    %v592 = vadd.f32 %v571, %v579
    %v593 = vadd.f32 %v573, %v579
    %v594 = vadd.f32 %v575, %v579
    %v595 = vadd.f32 %v577, %v579
    %v612 = vlaneseq
    %v613 = vand.u32 %v612, 127
    %v614 = vlaneseq
    %v615 = vshrl.u32 %v614, 7
    %v616 = vsub.s32 %v613, %v615
    %v617 = vrot.slane %v580, %v616
    %v618 = vadd.s32 %v613, 4294967288
    %v619 = vlaneseq
    %v620 = vshrl.u32 %v619, 7
    %v621 = vsub.s32 %v618, %v620
    %v622 = vrot.slane %v581, %v621
    %vm623 = vcmask 130112
    %v624 = vsel %vm623, %v622, %v617
    %v625 = vadd.s32 %v613, 4294967280
    %v626 = vlaneseq
    %v627 = vshrl.u32 %v626, 7
    %v628 = vsub.s32 %v625, %v627
    %v629 = vrot.slane %v582, %v628
    %vm630 = vcmask 195712
    %v631 = vsel %vm630, %v629, %v624
    %v632 = vadd.s32 %v613, 4294967272
    %v633 = vlaneseq
    %v634 = vshrl.u32 %v633, 7
    %v635 = vsub.s32 %v632, %v634
    %v636 = vrot.slane %v583, %v635
    %vm637 = vcmask 261312
    %v638 = vsel %vm637, %v636, %v631
    %v639 = vadd.s32 %v613, 4294967264
    %v640 = vlaneseq
    %v641 = vshrl.u32 %v640, 7
    %v642 = vsub.s32 %v639, %v641
    %v643 = vrot.slane %v584, %v642
    %vm644 = vcmask 326912
    %v645 = vsel %vm644, %v643, %v638
    %v646 = vadd.s32 %v613, 4294967256
    %v647 = vlaneseq
    %v648 = vshrl.u32 %v647, 7
    %v649 = vsub.s32 %v646, %v648
    %v650 = vrot.slane %v585, %v649
    %vm651 = vcmask 392512
    %v652 = vsel %vm651, %v650, %v645
    %v653 = vadd.s32 %v613, 4294967248
    %v654 = vlaneseq
    %v655 = vshrl.u32 %v654, 7
    %v656 = vsub.s32 %v653, %v655
    %v657 = vrot.slane %v586, %v656
    %vm658 = vcmask 458112
    %v659 = vsel %vm658, %v657, %v652
    %v660 = vadd.s32 %v613, 4294967240
    %v661 = vlaneseq
    %v662 = vshrl.u32 %v661, 7
    %v663 = vsub.s32 %v660, %v662
    %v664 = vrot.slane %v587, %v663
    %vm665 = vcmask 523712
    %v666 = vsel %vm665, %v664, %v659
    %v667 = vadd.s32 %v613, 4294967232
    %v668 = vlaneseq
    %v669 = vshrl.u32 %v668, 7
    %v670 = vsub.s32 %v667, %v669
    %v671 = vrot.slane %v588, %v670
    %vm672 = vcmask 589312
    %v673 = vsel %vm672, %v671, %v666
    %v674 = vadd.s32 %v613, 4294967224
    %v675 = vlaneseq
    %v676 = vshrl.u32 %v675, 7
    %v677 = vsub.s32 %v674, %v676
    %v678 = vrot.slane %v589, %v677
    %vm679 = vcmask 654912
    %v680 = vsel %vm679, %v678, %v673
    %v681 = vadd.s32 %v613, 4294967216
    %v682 = vlaneseq
    %v683 = vshrl.u32 %v682, 7
    %v684 = vsub.s32 %v681, %v683
    %v685 = vrot.slane %v590, %v684
    %vm686 = vcmask 720512
    %v687 = vsel %vm686, %v685, %v680
    %v688 = vadd.s32 %v613, 4294967208
    %v689 = vlaneseq
    %v690 = vshrl.u32 %v689, 7
    %v691 = vsub.s32 %v688, %v690
    %v692 = vrot.slane %v591, %v691
    %vm693 = vcmask 786112
    %v694 = vsel %vm693, %v692, %v687
    %v695 = vadd.s32 %v613, 4294967200
    %v696 = vlaneseq
    %v697 = vshrl.u32 %v696, 7
    %v698 = vsub.s32 %v695, %v697
    %v699 = vrot.slane %v592, %v698
    %vm700 = vcmask 851712
    %v701 = vsel %vm700, %v699, %v694
    %v702 = vadd.s32 %v613, 4294967192
    %v703 = vlaneseq
    %v704 = vshrl.u32 %v703, 7
    %v705 = vsub.s32 %v702, %v704
    %v706 = vrot.slane %v593, %v705
    %vm707 = vcmask 917312
    %v708 = vsel %vm707, %v706, %v701
    %v709 = vadd.s32 %v613, 4294967184
    %v710 = vlaneseq
    %v711 = vshrl.u32 %v710, 7
    %v712 = vsub.s32 %v709, %v711
    %v713 = vrot.slane %v594, %v712
    %vm714 = vcmask 982912
    %v715 = vsel %vm714, %v713, %v708
    %v716 = vadd.s32 %v613, 4294967176
    %v717 = vlaneseq
    %v718 = vshrl.u32 %v717, 7
    %v719 = vsub.s32 %v716, %v718
    %v720 = vrot.slane %v595, %v719
    %vm721 = vcmask 1048512
    %v722 = vsel %vm721, %v720, %v715
    %724 = vst [vmem:[#allocation3] sm:$0x1] %v722
    // Predicated region
    $region30: #{tpu_custom_call.1} parent=1 // pred_check
      _
    $region31: #{tpu_custom_call.1} parent=1 // pred_check_branch
      %726 = sbr.rel (0) target = $region33
    $region32: #{tpu_custom_call.1} parent=1 // pred_region
      %s728 = ssub.s32 16, 16
      %729 = vsyncadd [#allocation4], %s728
      %s731 = sshll.u32 [#allocation3], 4
      %s732 = int_to_ptr.vmem [resolvable:$true] %s731
      %734 = dma.vmem_to_hbm [thread:$0]  %s732, 16, %s7, [#allocation4]
    $region33: #{tpu_custom_call.1} parent=1 // pred_fallthru
      _
    // Predicated region
    $region34: #{tpu_custom_call.1} parent=1 // pred_check
      _
    $region35: #{tpu_custom_call.1} parent=1 // pred_check_branch
      %736 = sbr.rel (0) target = $region37
    $region36: #{tpu_custom_call.1} parent=1 // pred_region
      %737 = dma.done [#allocation4], 16
    $region37: #{tpu_custom_call.1} parent=1 // pred_fallthru
      _
    %738 = vsyncpa [#allocation4], 1

// kernel: tpu_custom_call.1
$region0: #{tpu_custom_call.1}
  #allocation0 [shape = 'u32[]', space=smem, size = 0x4, offset = 0x4, fixed_abs, tag = 'smem constant byte address 0x4 - core index']
  #allocation1 [shape = 'u32[144,128]{1,0:T(1,128)}', space=vmem, size = 0x12000, scoped, tag = 'internal scratch']
  #allocation2 [shape = 'f32[1]{0:T(128)S(6)}', space=smem, size = 0x200, scoped, tag = 'scoped memory for tpu_custom_call.1']
  %s0 = inlined_call_operand.vmem [shape: f32[128,32], index: 0, kind: input, shape index: {}]
  %s1 = inlined_call_operand.vmem [shape: bf16[32,256], index: 1, kind: input, shape index: {}]
  %s2 = inlined_call_operand.vmem [shape: f32[1,256], index: 2, kind: input, shape index: {}]
  %s3 = inlined_call_operand.vmem [shape: bf16[256,128], index: 3, kind: input, shape index: {}]
  %s4 = inlined_call_operand.vmem [shape: f32[1,128], index: 4, kind: input, shape index: {}]
  %s5 = inlined_call_operand.vmem [shape: f32[1,128], index: 5, kind: input, shape index: {}]
  %s6 = inlined_call_operand.<no memory space> [shape: f32[1], index: 6, kind: input, shape index: {}]
  %s7 = inlined_call_operand.hbm [shape: f32[1,1,128], index: 7, kind: output, shape index: {}]
  %s8 = sld [smem:[#allocation0]]
  $region38: #{tpu_custom_call.1} parent=0
    _
  %s10 = ssub.s32 1, %s8
  %s11 = scalar_select 0, %s10, %s8
  %12 = sst [smem:[#allocation2]] %s6
  $region1: #{tpu_custom_call.1} parent=0
    #allocation3 [shape = 'u8[512]{0}', space=vmem, size = 0x400, scoped, tag = 'output window, operand 0, single buffered']
    #allocation4 [shape = 's32[1]{0}', space=sflag, size = 0x4, scoped, tag = 'scoped memory for tpu_custom_call.1']
    %13 = vsyncpa [#allocation4], 0
    // Predicated region
    $region2: #{tpu_custom_call.1} parent=1 // pred_check
      _
    $region3: #{tpu_custom_call.1} parent=1 // pred_check_branch
      %15 = sbr.rel (0) target = $region5
    $region4: #{tpu_custom_call.1} parent=1 // pred_region
      _
    $region5: #{tpu_custom_call.1} parent=1 // pred_fallthru
      _
    // Predicated region
    $region6: #{tpu_custom_call.1} parent=1 // pred_check
      _
    $region7: #{tpu_custom_call.1} parent=1 // pred_check_branch
      %17 = sbr.rel (0) target = $region9
    $region8: #{tpu_custom_call.1} parent=1 // pred_region
      _
    $region9: #{tpu_custom_call.1} parent=1 // pred_fallthru
      _
    // Predicated region
    $region10: #{tpu_custom_call.1} parent=1 // pred_check
      _
    $region11: #{tpu_custom_call.1} parent=1 // pred_check_branch
      %19 = sbr.rel (0) target = $region13
    $region12: #{tpu_custom_call.1} parent=1 // pred_region
      _
    $region13: #{tpu_custom_call.1} parent=1 // pred_fallthru
      _
    // Predicated region
    $region14: #{tpu_custom_call.1} parent=1 // pred_check
      _
    $region15: #{tpu_custom_call.1} parent=1 // pred_check_branch
      %21 = sbr.rel (0) target = $region17
    $region16: #{tpu_custom_call.1} parent=1 // pred_region
      _
    $region17: #{tpu_custom_call.1} parent=1 // pred_fallthru
      _
    // Predicated region
    $region18: #{tpu_custom_call.1} parent=1 // pred_check
      _
    $region19: #{tpu_custom_call.1} parent=1 // pred_check_branch
      %23 = sbr.rel (0) target = $region21
    $region20: #{tpu_custom_call.1} parent=1 // pred_region
      _
    $region21: #{tpu_custom_call.1} parent=1 // pred_fallthru
      _
    // Predicated region
    $region22: #{tpu_custom_call.1} parent=1 // pred_check
      _
    $region23: #{tpu_custom_call.1} parent=1 // pred_check_branch
      %25 = sbr.rel (0) target = $region25
    $region24: #{tpu_custom_call.1} parent=1 // pred_region
      _
    $region25: #{tpu_custom_call.1} parent=1 // pred_fallthru
      _
    // Predicated region
    $region26: #{tpu_custom_call.1} parent=1 // pred_check
      _
    $region27: #{tpu_custom_call.1} parent=1 // pred_check_branch
      %27 = sbr.rel (0) target = $region29
    $region28: #{tpu_custom_call.1} parent=1 // pred_region
      _
    $region29: #{tpu_custom_call.1} parent=1 // pred_fallthru
      _
    %v29 = vld [vmem:[%s0] sm:$0xff]
    %v30 = vld [vmem:[%s0 + $0x8] sm:$0xff]
    %v31 = vld [vmem:[%s0 + $0x10] sm:$0xff]
    %v32 = vld [vmem:[%s0 + $0x18] sm:$0xff]
    %v33 = vld [vmem:[%s0 + $0x20] sm:$0xff]
    %v34 = vld [vmem:[%s0 + $0x28] sm:$0xff]
    %v35 = vld [vmem:[%s0 + $0x30] sm:$0xff]
    %v36 = vld [vmem:[%s0 + $0x38] sm:$0xff]
    %v37 = vld [vmem:[%s0 + $0x40] sm:$0xff]
    %v38 = vld [vmem:[%s0 + $0x48] sm:$0xff]
    %v39 = vld [vmem:[%s0 + $0x50] sm:$0xff]
    %v40 = vld [vmem:[%s0 + $0x58] sm:$0xff]
    %v41 = vld [vmem:[%s0 + $0x60] sm:$0xff]
    %v42 = vld [vmem:[%s0 + $0x68] sm:$0xff]
    %v43 = vld [vmem:[%s0 + $0x70] sm:$0xff]
    %v44 = vld [vmem:[%s0 + $0x78] sm:$0xff]
    %v45 = vpack.c.bf16 %v30, %v29
    %v46 = vpack.c.bf16 %v32, %v31
    %v47 = vpack.c.bf16 %v34, %v33
    %v48 = vpack.c.bf16 %v36, %v35
    %v49 = vpack.c.bf16 %v38, %v37
    %v50 = vpack.c.bf16 %v40, %v39
    %v51 = vpack.c.bf16 %v42, %v41
    %v52 = vpack.c.bf16 %v44, %v43
    %v53 = vld [vmem:[%s1] sm:$0xff]
    %v54 = vld [vmem:[%s1 + $0x8] sm:$0xff]
    %v55 = vld [vmem:[%s1 + $0x10] sm:$0xff]
    %v56 = vld [vmem:[%s1 + $0x18] sm:$0xff]
    %v57 = vld [vmem:[%s2] sm:$0x3]
    %v59 = vlaneseq
    %v60 = vshrl.u32 %v59, 7
    %v61 = vsub.s32 0, %v60
    %v62 = vrot.slane %v57, %v61
    %v63 = vlaneseq
    %v64 = vshrl.u32 %v63, 7
    %v65 = vsub.s32 1, %v64
    %v66 = vrot.slane %v57, %v65
    %v73 = vunpack.c.l.b16 %v53
    %v74 = vunpack.c.h.b16 %v53
    %v75 = vunpack.c.l.b16 %v54
    %v76 = vunpack.c.h.b16 %v54
    %v77 = vunpack.c.l.b16 %v55
    %v78 = vunpack.c.h.b16 %v55
    %v79 = vunpack.c.l.b16 %v56
    %v80 = vunpack.c.h.b16 %v56
    %v81 = vpack.c.b16 %v75, %v73
    %v82 = vpack.c.b16 %v76, %v74
    %v83 = vpack.c.b16 %v79, %v77
    %v84 = vpack.c.b16 %v80, %v78
    %vm89 = vcmask 261120
    %v91 = vsel %vm89, %v45, 0
    %v94 = vsel %vm89, %v46, 0
    %v97 = vsel %vm89, %v47, 0
    %v100 = vsel %vm89, %v48, 0
    %v103 = vsel %vm89, %v49, 0
    %v106 = vsel %vm89, %v50, 0
    %v109 = vsel %vm89, %v51, 0
    %v112 = vsel %vm89, %v52, 0
    %114 = vmatprep.subr.bf16.mxu0 %v82
    %115 = vmatpush1.bf16.msra.mxu0 %v81
    %116 = vmatprep.subr.bf16.mxu0 %v84
    %117 = vmatpush1.bf16.msra.mxu0 %v83
    %118 = vmatprep.subr.bf16.mxu0 0
    %119 = vmatpush1.bf16.msra.mxu0 0
    %120 = vmatprep.subr.bf16.mxu0 0
    %121 = vmatpush1.bf16.msra.mxu0 0
    %122 = vmatprep.subr.bf16.mxu0 0
    %123 = vmatpush1.bf16.msra.mxu0 0
    %124 = vmatprep.subr.bf16.mxu0 0
    %125 = vmatpush1.bf16.msra.mxu0 0
    %126 = vmatprep.subr.bf16.mxu0 0
    %127 = vmatpush1.bf16.msra.mxu0 0
    %128 = vmatprep.subr.bf16.mxu0 0
    %129 = vmatpush1.bf16.msra.mxu0 0
    %130 = vmatprep.subr.bf16.mxu0 0
    %131 = vmatpush1.bf16.msra.mxu0 0
    %132 = vmatprep.subr.bf16.mxu0 0
    %133 = vmatpush1.bf16.msra.mxu0 0
    %134 = vmatprep.subr.bf16.mxu0 0
    %135 = vmatpush1.bf16.msra.mxu0 0
    %136 = vmatprep.subr.bf16.mxu0 0
    %137 = vmatpush1.bf16.msra.mxu0 0
    %138 = vmatprep.subr.bf16.mxu0 0
    %139 = vmatpush1.bf16.msra.mxu0 0
    %140 = vmatprep.subr.bf16.mxu0 0
    %141 = vmatpush1.bf16.msra.mxu0 0
    %142 = vmatprep.subr.bf16.mxu0 0
    %143 = vmatpush1.bf16.msra.mxu0 0
    %144 = vmatprep.subr.bf16.mxu0 0
    %145 = vmatpush1.bf16.msra.mxu0 0
    %146 = vmatprep.mubr.bf16.mxu0 0
    %147 = vmatmul.mubr.bf16.gmra.mrb[0].mxu0 %v91
    %v148 = vpop.f32.mrb[0].mxu0
    %v149 = vadd.f32 %v62, %v148
    %v150 = vpop.f32.mrb[0].mxu0
    %v151 = vadd.f32 %v66, %v150
    %v152 = vpop.f32.mrb[0].mxu0
    %v153 = vadd.f32 %v62, %v152
    %v154 = vpop.f32.mrb[0].mxu0
    %v155 = vadd.f32 %v66, %v154
    %156 = vmatprep.mubr.bf16.mxu0 0
    %157 = vmatmul.mubr.bf16.gmra.mrb[0].mxu0 %v94
    %v158 = vpop.f32.mrb[0].mxu0
    %v159 = vadd.f32 %v62, %v158
    %v160 = vpop.f32.mrb[0].mxu0
    %v161 = vadd.f32 %v66, %v160
    %v162 = vpop.f32.mrb[0].mxu0
    %v163 = vadd.f32 %v62, %v162
    %v164 = vpop.f32.mrb[0].mxu0
    %v165 = vadd.f32 %v66, %v164
    %166 = vmatprep.mubr.bf16.mxu0 0
    %167 = vmatmul.mubr.bf16.gmra.mrb[0].mxu0 %v97
    %v168 = vpop.f32.mrb[0].mxu0
    %v169 = vadd.f32 %v62, %v168
    %v170 = vpop.f32.mrb[0].mxu0
    %v171 = vadd.f32 %v66, %v170
    %v172 = vpop.f32.mrb[0].mxu0
    %v173 = vadd.f32 %v62, %v172
    %v174 = vpop.f32.mrb[0].mxu0
    %v175 = vadd.f32 %v66, %v174
    %176 = vmatprep.mubr.bf16.mxu0 0
    %177 = vmatmul.mubr.bf16.gmra.mrb[0].mxu0 %v100
    %v178 = vpop.f32.mrb[0].mxu0
    %v179 = vadd.f32 %v62, %v178
    %v180 = vpop.f32.mrb[0].mxu0
    %v181 = vadd.f32 %v66, %v180
    %v182 = vpop.f32.mrb[0].mxu0
    %v183 = vadd.f32 %v62, %v182
    %v184 = vpop.f32.mrb[0].mxu0
    %v185 = vadd.f32 %v66, %v184
    %186 = vmatprep.mubr.bf16.mxu0 0
    %187 = vmatmul.mubr.bf16.gmra.mrb[0].mxu0 %v103
    %v188 = vpop.f32.mrb[0].mxu0
    %v189 = vadd.f32 %v62, %v188
    %v190 = vpop.f32.mrb[0].mxu0
    %v191 = vadd.f32 %v66, %v190
    %v192 = vpop.f32.mrb[0].mxu0
    %v193 = vadd.f32 %v62, %v192
    %v194 = vpop.f32.mrb[0].mxu0
    %v195 = vadd.f32 %v66, %v194
    %196 = vmatprep.mubr.bf16.mxu0 0
    %197 = vmatmul.mubr.bf16.gmra.mrb[0].mxu0 %v106
    %v198 = vpop.f32.mrb[0].mxu0
    %v199 = vadd.f32 %v62, %v198
    %v200 = vpop.f32.mrb[0].mxu0
    %v201 = vadd.f32 %v66, %v200
    %v202 = vpop.f32.mrb[0].mxu0
    %v203 = vadd.f32 %v62, %v202
    %v204 = vpop.f32.mrb[0].mxu0
    %v205 = vadd.f32 %v66, %v204
    %206 = vmatprep.mubr.bf16.mxu0 0
    %207 = vmatmul.mubr.bf16.gmra.mrb[0].mxu0 %v109
    %v208 = vpop.f32.mrb[0].mxu0
    %v209 = vadd.f32 %v62, %v208
    %v210 = vpop.f32.mrb[0].mxu0
    %v211 = vadd.f32 %v66, %v210
    %v212 = vpop.f32.mrb[0].mxu0
    %v213 = vadd.f32 %v62, %v212
    %v214 = vpop.f32.mrb[0].mxu0
    %v215 = vadd.f32 %v66, %v214
    %216 = vmatprep.mubr.bf16.mxu0 0
    %217 = vmatmul.mubr.bf16.gmra.mrb[0].mxu0 %v112
    %v218 = vpop.f32.mrb[0].mxu0
    %v219 = vadd.f32 %v62, %v218
    %v220 = vpop.f32.mrb[0].mxu0
    %v221 = vadd.f32 %v66, %v220
    %v222 = vpop.f32.mrb[0].mxu0
    %v223 = vadd.f32 %v62, %v222
    %v224 = vpop.f32.mrb[0].mxu0
    %v225 = vadd.f32 %v66, %v224
    %226 = vdwg.mxu0
    %v227 = vmax.f32 %v149, 0.0
    %v228 = vmax.f32 %v151, 0.0
    %v229 = vmax.f32 %v153, 0.0
    %v230 = vmax.f32 %v155, 0.0
    %v231 = vmax.f32 %v159, 0.0
    %v232 = vmax.f32 %v161, 0.0
    %v233 = vmax.f32 %v163, 0.0
    %v234 = vmax.f32 %v165, 0.0
    %v235 = vmax.f32 %v169, 0.0
    %v236 = vmax.f32 %v171, 0.0
    %v237 = vmax.f32 %v173, 0.0
    %v238 = vmax.f32 %v175, 0.0
    %v239 = vmax.f32 %v179, 0.0
    %v240 = vmax.f32 %v181, 0.0
    %v241 = vmax.f32 %v183, 0.0
    %v242 = vmax.f32 %v185, 0.0
    %v243 = vmax.f32 %v189, 0.0
    %v244 = vmax.f32 %v191, 0.0
    %v245 = vmax.f32 %v193, 0.0
    %v246 = vmax.f32 %v195, 0.0
    %v247 = vmax.f32 %v199, 0.0
    %v248 = vmax.f32 %v201, 0.0
    %v249 = vmax.f32 %v203, 0.0
    %v250 = vmax.f32 %v205, 0.0
    %v251 = vmax.f32 %v209, 0.0
    %v252 = vmax.f32 %v211, 0.0
    %v253 = vmax.f32 %v213, 0.0
    %v254 = vmax.f32 %v215, 0.0
    %v255 = vmax.f32 %v219, 0.0
    %v256 = vmax.f32 %v221, 0.0
    %v257 = vmax.f32 %v223, 0.0
    %v258 = vmax.f32 %v225, 0.0
    %v259 = vpack.c.bf16 %v229, %v227
    %v260 = vpack.c.bf16 %v230, %v228
    %v261 = vpack.c.bf16 %v233, %v231
    %v262 = vpack.c.bf16 %v234, %v232
    %v263 = vpack.c.bf16 %v237, %v235
    %v264 = vpack.c.bf16 %v238, %v236
    %v265 = vpack.c.bf16 %v241, %v239
    %v266 = vpack.c.bf16 %v242, %v240
    %v267 = vpack.c.bf16 %v245, %v243
    %v268 = vpack.c.bf16 %v246, %v244
    %v269 = vpack.c.bf16 %v249, %v247
    %v270 = vpack.c.bf16 %v250, %v248
    %v271 = vpack.c.bf16 %v253, %v251
    %v272 = vpack.c.bf16 %v254, %v252
    %v273 = vpack.c.bf16 %v257, %v255
    %v274 = vpack.c.bf16 %v258, %v256
    %v275 = vld [vmem:[%s3] sm:$0xf]
    %v276 = vld [vmem:[%s3 + $0x4] sm:$0xf]
    %v277 = vld [vmem:[%s3 + $0x8] sm:$0xf]
    %v278 = vld [vmem:[%s3 + $0xc] sm:$0xf]
    %v279 = vld [vmem:[%s3 + $0x10] sm:$0xf]
    %v280 = vld [vmem:[%s3 + $0x14] sm:$0xf]
    %v281 = vld [vmem:[%s3 + $0x18] sm:$0xf]
    %v282 = vld [vmem:[%s3 + $0x1c] sm:$0xf]
    %v283 = vld [vmem:[%s3 + $0x20] sm:$0xf]
    %v284 = vld [vmem:[%s3 + $0x24] sm:$0xf]
    %v285 = vld [vmem:[%s3 + $0x28] sm:$0xf]
    %v286 = vld [vmem:[%s3 + $0x2c] sm:$0xf]
    %v287 = vld [vmem:[%s3 + $0x30] sm:$0xf]
    %v288 = vld [vmem:[%s3 + $0x34] sm:$0xf]
    %v289 = vld [vmem:[%s3 + $0x38] sm:$0xf]
    %v290 = vld [vmem:[%s3 + $0x3c] sm:$0xf]
    %v291 = vld [vmem:[%s3 + $0x40] sm:$0xf]
    %v292 = vld [vmem:[%s3 + $0x44] sm:$0xf]
    %v293 = vld [vmem:[%s3 + $0x48] sm:$0xf]
    %v294 = vld [vmem:[%s3 + $0x4c] sm:$0xf]
    %v295 = vld [vmem:[%s3 + $0x50] sm:$0xf]
    %v296 = vld [vmem:[%s3 + $0x54] sm:$0xf]
    %v297 = vld [vmem:[%s3 + $0x58] sm:$0xf]
    %v298 = vld [vmem:[%s3 + $0x5c] sm:$0xf]
    %v299 = vld [vmem:[%s3 + $0x60] sm:$0xf]
    %v300 = vld [vmem:[%s3 + $0x64] sm:$0xf]
    %v301 = vld [vmem:[%s3 + $0x68] sm:$0xf]
    %v302 = vld [vmem:[%s3 + $0x6c] sm:$0xf]
    %v303 = vld [vmem:[%s3 + $0x70] sm:$0xf]
    %v304 = vld [vmem:[%s3 + $0x74] sm:$0xf]
    %v305 = vld [vmem:[%s3 + $0x78] sm:$0xf]
    %v306 = vld [vmem:[%s3 + $0x7c] sm:$0xf]
    %v307 = vld [vmem:[%s4] sm:$0x1]
    %v309 = vlaneseq
    %v310 = vshrl.u32 %v309, 7
    %v311 = vsub.s32 0, %v310
    %v312 = vrot.slane %v307, %v311
    %v346 = vunpack.c.l.b16 %v275
    %v347 = vunpack.c.l.b16 %v276
    %v348 = vunpack.c.l.b16 %v277
    %v349 = vunpack.c.l.b16 %v278
    %v350 = vunpack.c.l.b16 %v279
    %v351 = vunpack.c.l.b16 %v280
    %v352 = vunpack.c.l.b16 %v281
    %v353 = vunpack.c.l.b16 %v282
    %v354 = vunpack.c.l.b16 %v283
    %v355 = vunpack.c.l.b16 %v284
    %v356 = vunpack.c.l.b16 %v285
    %v357 = vunpack.c.l.b16 %v286
    %v358 = vunpack.c.l.b16 %v287
    %v359 = vunpack.c.l.b16 %v288
    %v360 = vunpack.c.l.b16 %v289
    %v361 = vunpack.c.l.b16 %v290
    %v362 = vunpack.c.l.b16 %v291
    %v363 = vunpack.c.l.b16 %v292
    %v364 = vunpack.c.l.b16 %v293
    %v365 = vunpack.c.l.b16 %v294
    %v366 = vunpack.c.l.b16 %v295
    %v367 = vunpack.c.l.b16 %v296
    %v368 = vunpack.c.l.b16 %v297
    %v369 = vunpack.c.l.b16 %v298
    %v370 = vunpack.c.l.b16 %v299
    %v371 = vunpack.c.l.b16 %v300
    %v372 = vunpack.c.l.b16 %v301
    %v373 = vunpack.c.l.b16 %v302
    %v374 = vunpack.c.l.b16 %v303
    %v375 = vunpack.c.l.b16 %v304
    %v376 = vunpack.c.l.b16 %v305
    %v377 = vunpack.c.l.b16 %v306
    %v378 = vpack.c.b16 %v347, %v346
    %v379 = vpack.c.b16 %v349, %v348
    %v380 = vpack.c.b16 %v351, %v350
    %v381 = vpack.c.b16 %v353, %v352
    %v382 = vpack.c.b16 %v355, %v354
    %v383 = vpack.c.b16 %v357, %v356
    %v384 = vpack.c.b16 %v359, %v358
    %v385 = vpack.c.b16 %v361, %v360
    %v386 = vpack.c.b16 %v363, %v362
    %v387 = vpack.c.b16 %v365, %v364
    %v388 = vpack.c.b16 %v367, %v366
    %v389 = vpack.c.b16 %v369, %v368
    %v390 = vpack.c.b16 %v371, %v370
    %v391 = vpack.c.b16 %v373, %v372
    %v392 = vpack.c.b16 %v375, %v374
    %v393 = vpack.c.b16 %v377, %v376
    %410 = vmatprep.subr.bf16.mxu0 0
    %411 = vmatpush1.bf16.msra.mxu0 %v378
    %412 = vmatprep.subr.bf16.mxu0 0
    %413 = vmatpush1.bf16.msra.mxu0 %v379
    %414 = vmatprep.subr.bf16.mxu0 0
    %415 = vmatpush1.bf16.msra.mxu0 %v380
    %416 = vmatprep.subr.bf16.mxu0 0
    %417 = vmatpush1.bf16.msra.mxu0 %v381
    %418 = vmatprep.subr.bf16.mxu0 0
    %419 = vmatpush1.bf16.msra.mxu0 %v382
    %420 = vmatprep.subr.bf16.mxu0 0
    %421 = vmatpush1.bf16.msra.mxu0 %v383
    %422 = vmatprep.subr.bf16.mxu0 0
    %423 = vmatpush1.bf16.msra.mxu0 %v384
    %424 = vmatprep.subr.bf16.mxu0 0
    %425 = vmatpush1.bf16.msra.mxu0 %v385
    %426 = vmatprep.subr.bf16.mxu0 0
    %427 = vmatpush1.bf16.msra.mxu0 %v386
    %428 = vmatprep.subr.bf16.mxu0 0
    %429 = vmatpush1.bf16.msra.mxu0 %v387
    %430 = vmatprep.subr.bf16.mxu0 0
    %431 = vmatpush1.bf16.msra.mxu0 %v388
    %432 = vmatprep.subr.bf16.mxu0 0
    %433 = vmatpush1.bf16.msra.mxu0 %v389
    %434 = vmatprep.subr.bf16.mxu0 0
    %435 = vmatpush1.bf16.msra.mxu0 %v390
    %436 = vmatprep.subr.bf16.mxu0 0
    %437 = vmatpush1.bf16.msra.mxu0 %v391
    %438 = vmatprep.subr.bf16.mxu0 0
    %439 = vmatpush1.bf16.msra.mxu0 %v392
    %440 = vmatprep.subr.bf16.mxu0 0
    %441 = vmatpush1.bf16.msra.mxu0 %v393
    %442 = vmatprep.mubr.bf16.mxu0 %v260
    %443 = vmatmul.mubr.bf16.gmra.mrb[0].mxu0 %v259
    %v444 = vpop.f32.mrb[0].mxu0
    %v445 = vadd.f32 %v312, %v444
    %v446 = vpop.f32.mrb[0].mxu0
    %v447 = vpop.f32.mrb[0].mxu0
    %v448 = vadd.f32 %v312, %v447
    %v449 = vpop.f32.mrb[0].mxu0
    %450 = vmatprep.mubr.bf16.mxu0 %v262
    %451 = vmatmul.mubr.bf16.gmra.mrb[0].mxu0 %v261
    %v452 = vpop.f32.mrb[0].mxu0
    %v453 = vadd.f32 %v312, %v452
    %v454 = vpop.f32.mrb[0].mxu0
    %v455 = vpop.f32.mrb[0].mxu0
    %v456 = vadd.f32 %v312, %v455
    %v457 = vpop.f32.mrb[0].mxu0
    %458 = vmatprep.mubr.bf16.mxu0 %v264
    %459 = vmatmul.mubr.bf16.gmra.mrb[0].mxu0 %v263
    %v460 = vpop.f32.mrb[0].mxu0
    %v461 = vadd.f32 %v312, %v460
    %v462 = vpop.f32.mrb[0].mxu0
    %v463 = vpop.f32.mrb[0].mxu0
    %v464 = vadd.f32 %v312, %v463
    %v465 = vpop.f32.mrb[0].mxu0
    %466 = vmatprep.mubr.bf16.mxu0 %v266
    %467 = vmatmul.mubr.bf16.gmra.mrb[0].mxu0 %v265
    %v468 = vpop.f32.mrb[0].mxu0
    %v469 = vadd.f32 %v312, %v468
    %v470 = vpop.f32.mrb[0].mxu0
    %v471 = vpop.f32.mrb[0].mxu0
    %v472 = vadd.f32 %v312, %v471
    %v473 = vpop.f32.mrb[0].mxu0
    %474 = vmatprep.mubr.bf16.mxu0 %v268
    %475 = vmatmul.mubr.bf16.gmra.mrb[0].mxu0 %v267
    %v476 = vpop.f32.mrb[0].mxu0
    %v477 = vadd.f32 %v312, %v476
    %v478 = vpop.f32.mrb[0].mxu0
    %v479 = vpop.f32.mrb[0].mxu0
    %v480 = vadd.f32 %v312, %v479
    %v481 = vpop.f32.mrb[0].mxu0
    %482 = vmatprep.mubr.bf16.mxu0 %v270
    %483 = vmatmul.mubr.bf16.gmra.mrb[0].mxu0 %v269
    %v484 = vpop.f32.mrb[0].mxu0
    %v485 = vadd.f32 %v312, %v484
    %v486 = vpop.f32.mrb[0].mxu0
    %v487 = vpop.f32.mrb[0].mxu0
    %v488 = vadd.f32 %v312, %v487
    %v489 = vpop.f32.mrb[0].mxu0
    %490 = vmatprep.mubr.bf16.mxu0 %v272
    %491 = vmatmul.mubr.bf16.gmra.mrb[0].mxu0 %v271
    %v492 = vpop.f32.mrb[0].mxu0
    %v493 = vadd.f32 %v312, %v492
    %v494 = vpop.f32.mrb[0].mxu0
    %v495 = vpop.f32.mrb[0].mxu0
    %v496 = vadd.f32 %v312, %v495
    %v497 = vpop.f32.mrb[0].mxu0
    %498 = vmatprep.mubr.bf16.mxu0 %v274
    %499 = vmatmul.mubr.bf16.gmra.mrb[0].mxu0 %v273
    %v500 = vpop.f32.mrb[0].mxu0
    %v501 = vadd.f32 %v312, %v500
    %v502 = vpop.f32.mrb[0].mxu0
    %v503 = vpop.f32.mrb[0].mxu0
    %v504 = vadd.f32 %v312, %v503
    %v505 = vpop.f32.mrb[0].mxu0
    %506 = vdwg.mxu0
    %v507 = vmax.f32 %v445, 0.0
    %v508 = vmax.f32 %v448, 0.0
    %v509 = vmax.f32 %v453, 0.0
    %v510 = vmax.f32 %v456, 0.0
    %v511 = vmax.f32 %v461, 0.0
    %v512 = vmax.f32 %v464, 0.0
    %v513 = vmax.f32 %v469, 0.0
    %v514 = vmax.f32 %v472, 0.0
    %v515 = vmax.f32 %v477, 0.0
    %v516 = vmax.f32 %v480, 0.0
    %v517 = vmax.f32 %v485, 0.0
    %v518 = vmax.f32 %v488, 0.0
    %v519 = vmax.f32 %v493, 0.0
    %v520 = vmax.f32 %v496, 0.0
    %v521 = vmax.f32 %v501, 0.0
    %v522 = vmax.f32 %v504, 0.0
    %v523 = vld [vmem:[%s5] sm:$0x1]
    %v525 = vlaneseq
    %v526 = vshrl.u32 %v525, 7
    %v527 = vsub.s32 0, %v526
    %v528 = vrot.slane %v523, %v527
    %v530 = vmul.f32 %v507, %v528
    %v531 = vmul.f32 %v508, %v528
    %v532 = vmul.f32 %v509, %v528
    %v533 = vmul.f32 %v510, %v528
    %v534 = vmul.f32 %v511, %v528
    %v535 = vmul.f32 %v512, %v528
    %v536 = vmul.f32 %v513, %v528
    %v537 = vmul.f32 %v514, %v528
    %v538 = vmul.f32 %v515, %v528
    %v539 = vmul.f32 %v516, %v528
    %v540 = vmul.f32 %v517, %v528
    %v541 = vmul.f32 %v518, %v528
    %v542 = vmul.f32 %v519, %v528
    %v543 = vmul.f32 %v520, %v528
    %v544 = vmul.f32 %v521, %v528
    %v545 = vmul.f32 %v522, %v528
    %546 = vadd.xlane.f32.xlu0 %v530
    %v547 = vpop.xlane.xlu0 %546
    %548 = vadd.xlane.f32.xlu0 %v531
    %v549 = vpop.xlane.xlu0 %548
    %550 = vadd.xlane.f32.xlu0 %v532
    %v551 = vpop.xlane.xlu0 %550
    %552 = vadd.xlane.f32.xlu0 %v533
    %v553 = vpop.xlane.xlu0 %552
    %554 = vadd.xlane.f32.xlu0 %v534
    %v555 = vpop.xlane.xlu0 %554
    %556 = vadd.xlane.f32.xlu0 %v535
    %v557 = vpop.xlane.xlu0 %556
    %558 = vadd.xlane.f32.xlu0 %v536
    %v559 = vpop.xlane.xlu0 %558
    %560 = vadd.xlane.f32.xlu0 %v537
    %v561 = vpop.xlane.xlu0 %560
    %562 = vadd.xlane.f32.xlu0 %v538
    %v563 = vpop.xlane.xlu0 %562
    %564 = vadd.xlane.f32.xlu0 %v539
    %v565 = vpop.xlane.xlu0 %564
    %566 = vadd.xlane.f32.xlu0 %v540
    %v567 = vpop.xlane.xlu0 %566
    %568 = vadd.xlane.f32.xlu0 %v541
    %v569 = vpop.xlane.xlu0 %568
    %570 = vadd.xlane.f32.xlu0 %v542
    %v571 = vpop.xlane.xlu0 %570
    %572 = vadd.xlane.f32.xlu0 %v543
    %v573 = vpop.xlane.xlu0 %572
    %574 = vadd.xlane.f32.xlu0 %v544
    %v575 = vpop.xlane.xlu0 %574
    %576 = vadd.xlane.f32.xlu0 %v545
    %v577 = vpop.xlane.xlu0 %576
    %s578 = sld [smem:[#allocation2]]
    %v579 = vstv %s578
    %v580 = vadd.f32 %v547, %v579
    %v581 = vadd.f32 %v549, %v579
    %v582 = vadd.f32 %v551, %v579
    %v583 = vadd.f32 %v553, %v579
    %v584 = vadd.f32 %v555, %v579
    %v585 = vadd.f32 %v557, %v579
    %v586 = vadd.f32 %v559, %v579
    %v587 = vadd.f32 %v561, %v579
    %v588 = vadd.f32 %v563, %v579
    %v589 = vadd.f32 %v565, %v579
    %v590 = vadd.f32 %v567, %v579
    %v591 = vadd.f32 %v569, %v579
    %v592 = vadd.f32 %v571, %v579
    %v593 = vadd.f32 %v573, %v579
    %v594 = vadd.f32 %v575, %v579
    %v595 = vadd.f32 %v577, %v579
    %v612 = vlaneseq
    %v613 = vand.u32 %v612, 127
    %v614 = vlaneseq
    %v615 = vshrl.u32 %v614, 7
    %v616 = vsub.s32 %v613, %v615
    %v617 = vrot.slane %v580, %v616
    %v618 = vadd.s32 %v613, 4294967288
    %v619 = vlaneseq
    %v620 = vshrl.u32 %v619, 7
    %v621 = vsub.s32 %v618, %v620
    %v622 = vrot.slane %v581, %v621
    %vm623 = vcmask 130112
    %v624 = vsel %vm623, %v622, %v617
    %v625 = vadd.s32 %v613, 4294967280
    %v626 = vlaneseq
    %v627 = vshrl.u32 %v626, 7
    %v628 = vsub.s32 %v625, %v627
    %v629 = vrot.slane %v582, %v628
    %vm630 = vcmask 195712
    %v631 = vsel %vm630, %v629, %v624
    %v632 = vadd.s32 %v613, 4294967272
    %v633 = vlaneseq
    %v634 = vshrl.u32 %v633, 7
    %v635 = vsub.s32 %v632, %v634
    %v636 = vrot.slane %v583, %v635
    %vm637 = vcmask 261312
    %v638 = vsel %vm637, %v636, %v631
    %v639 = vadd.s32 %v613, 4294967264
    %v640 = vlaneseq
    %v641 = vshrl.u32 %v640, 7
    %v642 = vsub.s32 %v639, %v641
    %v643 = vrot.slane %v584, %v642
    %vm644 = vcmask 326912
    %v645 = vsel %vm644, %v643, %v638
    %v646 = vadd.s32 %v613, 4294967256
    %v647 = vlaneseq
    %v648 = vshrl.u32 %v647, 7
    %v649 = vsub.s32 %v646, %v648
    %v650 = vrot.slane %v585, %v649
    %vm651 = vcmask 392512
    %v652 = vsel %vm651, %v650, %v645
    %v653 = vadd.s32 %v613, 4294967248
    %v654 = vlaneseq
    %v655 = vshrl.u32 %v654, 7
    %v656 = vsub.s32 %v653, %v655
    %v657 = vrot.slane %v586, %v656
    %vm658 = vcmask 458112
    %v659 = vsel %vm658, %v657, %v652
    %v660 = vadd.s32 %v613, 4294967240
    %v661 = vlaneseq
    %v662 = vshrl.u32 %v661, 7
    %v663 = vsub.s32 %v660, %v662
    %v664 = vrot.slane %v587, %v663
    %vm665 = vcmask 523712
    %v666 = vsel %vm665, %v664, %v659
    %v667 = vadd.s32 %v613, 4294967232
    %v668 = vlaneseq
    %v669 = vshrl.u32 %v668, 7
    %v670 = vsub.s32 %v667, %v669
    %v671 = vrot.slane %v588, %v670
    %vm672 = vcmask 589312
    %v673 = vsel %vm672, %v671, %v666
    %v674 = vadd.s32 %v613, 4294967224
    %v675 = vlaneseq
    %v676 = vshrl.u32 %v675, 7
    %v677 = vsub.s32 %v674, %v676
    %v678 = vrot.slane %v589, %v677
    %vm679 = vcmask 654912
    %v680 = vsel %vm679, %v678, %v673
    %v681 = vadd.s32 %v613, 4294967216
    %v682 = vlaneseq
    %v683 = vshrl.u32 %v682, 7
    %v684 = vsub.s32 %v681, %v683
    %v685 = vrot.slane %v590, %v684
    %vm686 = vcmask 720512
    %v687 = vsel %vm686, %v685, %v680
    %v688 = vadd.s32 %v613, 4294967208
    %v689 = vlaneseq
    %v690 = vshrl.u32 %v689, 7
    %v691 = vsub.s32 %v688, %v690
    %v692 = vrot.slane %v591, %v691
    %vm693 = vcmask 786112
    %v694 = vsel %vm693, %v692, %v687
    %v695 = vadd.s32 %v613, 4294967200
    %v696 = vlaneseq
    %v697 = vshrl.u32 %v696, 7
    %v698 = vsub.s32 %v695, %v697
    %v699 = vrot.slane %v592, %v698
    %vm700 = vcmask 851712
    %v701 = vsel %vm700, %v699, %v694
    %v702 = vadd.s32 %v613, 4294967192
    %v703 = vlaneseq
    %v704 = vshrl.u32 %v703, 7
    %v705 = vsub.s32 %v702, %v704
    %v706 = vrot.slane %v593, %v705
    %vm707 = vcmask 917312
    %v708 = vsel %vm707, %v706, %v701
    %v709 = vadd.s32 %v613, 4294967184
    %v710 = vlaneseq
    %v711 = vshrl.u32 %v710, 7
    %v712 = vsub.s32 %v709, %v711
    %v713 = vrot.slane %v594, %v712
    %vm714 = vcmask 982912
    %v715 = vsel %vm714, %v713, %v708
    %v716 = vadd.s32 %v613, 4294967176
    %v717 = vlaneseq
    %v718 = vshrl.u32 %v717, 7
    %v719 = vsub.s32 %v716, %v718
    %v720 = vrot.slane %v595, %v719
    %vm721 = vcmask 1048512
    %v722 = vsel %vm721, %v720, %v715
    %724 = vst [vmem:[#allocation3] sm:$0x1] %v722
    // Predicated region
    $region30: #{tpu_custom_call.1} parent=1 // pred_check
      _
    $region31: #{tpu_custom_call.1} parent=1 // pred_check_branch
      %726 = sbr.rel (0) target = $region33
    $region32: #{tpu_custom_call.1} parent=1 // pred_region
      %s728 = ssub.s32 16, 16
      %729 = vsyncadd [#allocation4], %s728
      %s731 = sshll.u32 [#allocation3], 4
      %s732 = int_to_ptr.vmem [resolvable:$true] %s731
      %734 = dma.vmem_to_hbm [thread:$0]  %s732, 16, %s7, [#allocation4]
    $region33: #{tpu_custom_call.1} parent=1 // pred_fallthru
      _
    // Predicated region
    $region34: #{tpu_custom_call.1} parent=1 // pred_check
      _
    $region35: #{tpu_custom_call.1} parent=1 // pred_check_branch
      %736 = sbr.rel (0) target = $region37
    $region36: #{tpu_custom_call.1} parent=1 // pred_region
      %737 = dma.done [#allocation4], 16
    $region37: #{tpu_custom_call.1} parent=1 // pred_fallthru
      _
    %738 = vsyncpa [#allocation4], 1

</llo_original>
